<compile_context>
chip_gen: v7x
topology: tpu7x:2x2x1
jax: 0.10.0
libtpu: 0.0.40
codegen_flags: <defaults>
</compile_context>

<pallas_src>
import functools

import jax
import jax.numpy as jnp
from jax.experimental import pallas as pl
from jax.experimental.pallas import tpu as pltpu


def _layernorm(x, g, b, eps=1e-5):
    mu = jnp.mean(x, axis=-1, keepdims=True)
    var = jnp.mean(jnp.square(x - mu), axis=-1, keepdims=True)
    return (x - mu) * jax.lax.rsqrt(var + eps) * g + b


# ----------------------------------------------------------------------------
# Fused kernel: one (batch row, stage, block) step of the whole forward
# ----------------------------------------------------------------------------
def _fused_forward_kernel(sample0_ref, x_ref, eps_ref, cls_ref,
                          wqkv_ref, wo_ref, w1_ref, w2_ref,
                          vecd_ref, vecm_ref,
                          o_ref,
                          tok_ref, sample_ref, qkv_ref, attn_ref,
                          *, words, num_cls, heads, dim_head,
                          depth, depth_block, n_tok, n_tok_pad):
    s = pl.program_id(1)                 # encoder stage
    l = pl.program_id(2)                 # transformer block within the stage
    dim = o_ref.shape[-1]
    inner = heads * dim_head
    scale = dim_head ** -0.5
    bf16 = jnp.bfloat16
    f32 = jnp.float32

    # -- first block of this batch row: prime the carried latent sample
    @pl.when(jnp.logical_and(s == 0, l == 0))
    def _():
        sample_ref[...] = sample0_ref[...]

    # -- stage start: rebuild the resident, sublane-padded token slab
    #    rows: [cls_0, cls_1, x_0..x_{words-1}, sample, zero padding]
    @pl.when(l == 0)
    def _():
        tok_ref[...] = jnp.zeros((n_tok_pad, dim), f32)
        tok_ref[0:num_cls, :] = cls_ref[s][:num_cls]
        tok_ref[num_cls:num_cls + words, :] = x_ref[...]
        tok_ref[num_cls + words:num_cls + words + 1, :] = sample_ref[...]

    # -- packed per-(stage, block) channel params (fully VMEM-resident)
    blk = s * depth_block + l
    vd = vecd_ref[blk]                   # (8, dim)
    vm = vecm_ref[blk]                   # (8, mlp_dim)
    ln1g, ln1b, bo = vd[0:1], vd[1:2], vd[2:3]
    ln2g, ln2b, b2 = vd[3:4], vd[4:5], vd[5:6]
    b1 = vm[0:1]

    # -- multi-head self-attention (pre-norm)
    x = tok_ref[...]                                          # (Np, dim) f32
    xn = _layernorm(x, ln1g, ln1b)
    # one fused QKV matmul, staged through VMEM (bounds vreg live ranges)
    qkv_ref[...] = jnp.dot(xn.astype(bf16), wqkv_ref[...],
                           preferred_element_type=f32)        # (Np, 3*inner)

    key_idx = jax.lax.broadcasted_iota(jnp.int32, (n_tok_pad, n_tok_pad), 1)
    key_mask = key_idx < n_tok                                # mask pad keys

    # heads is small: static unroll keeps all lane slices static & 128-aligned
    for h in range(heads):
        c = h * dim_head
        q = qkv_ref[:, c:c + dim_head].astype(bf16)
        k = qkv_ref[:, inner + c:inner + c + dim_head].astype(bf16)
        v = qkv_ref[:, 2 * inner + c:2 * inner + c + dim_head].astype(bf16)
        sc = jax.lax.dot_general(q, k, (((1,), (1,)), ((), ())),
                                 preferred_element_type=f32) * scale
        sc = jnp.where(key_mask, sc, -1e30)                   # softmax in f32
        sc = sc - jnp.max(sc, axis=-1, keepdims=True)
        p = jnp.exp(sc)
        p = p * pl.reciprocal(jnp.sum(p, axis=-1, keepdims=True), approx=True)
        attn_ref[:, c:c + dim_head] = jnp.dot(p.astype(bf16), v,
                                              preferred_element_type=f32)

    # single K=inner projection through the full W_o for all heads at once
    proj = jnp.dot(attn_ref[...].astype(bf16), wo_ref[...],
                   preferred_element_type=f32) + bo
    tok_ref[...] = x + proj

    # -- MLP (pre-norm) with residual, whole padded slab at once
    x2 = tok_ref[...]
    xn2 = _layernorm(x2, ln2g, ln2b)
    h1 = jnp.dot(xn2.astype(bf16), w1_ref[...], preferred_element_type=f32) + b1
    h1 = jax.nn.gelu(h1, approximate=True)
    h2 = jnp.dot(h1.astype(bf16), w2_ref[...], preferred_element_type=f32) + b2
    tok_ref[...] = x2 + h2

    # -- end of stage: reparameterize into the carried sample
    #    sample = mu + eps * tanh(exp(0.5 * logvar))   (matches the module)
    @pl.when(l == depth_block - 1)
    def _():
        top = tok_ref[0:8, :]            # aligned 8-row load; rows 0/1 valid
        mu, logvar = top[0:1, :], top[1:2, :]
        std = jnp.exp(0.5 * logvar)
        sample_ref[...] = mu + eps_ref[...] * jnp.tanh(std)

    # -- very last block of last stage: emit mu_logvar = tokens[:2]
    @pl.when(jnp.logical_and(s == depth - 1, l == depth_block - 1))
    def _():
        o_ref[...] = tok_ref[0:2, :]


# ----------------------------------------------------------------------------
# Parameter construction (deterministic, synthetic, stacked for the
# (stage, block) grid; weight matrices stored in bf16 for MXU-native matmuls)
# ----------------------------------------------------------------------------
def build_params(key, *, dim, depth, depth_block, heads, dim_head, mlp_dim,
                 num_cls=2):
    inner = heads * dim_head
    w_scale = 0.02
    ks = jax.random.split(key, 6)
    params = {
        "init_mu": jax.random.normal(ks[0], (1, 1, dim), jnp.float32),
        "wqkv": (w_scale * jax.random.normal(
            ks[2], (depth, depth_block, dim, 3 * inner), jnp.float32)
                 ).astype(jnp.bfloat16),
        "wo": (w_scale * jax.random.normal(
            ks[3], (depth, depth_block, inner, dim), jnp.float32)
               ).astype(jnp.bfloat16),
        "w1": (w_scale * jax.random.normal(
            ks[4], (depth, depth_block, dim, mlp_dim), jnp.float32)
               ).astype(jnp.bfloat16),
        "w2": (w_scale * jax.random.normal(
            ks[5], (depth, depth_block, mlp_dim, dim), jnp.float32)
               ).astype(jnp.bfloat16),
    }
    # cls tokens padded to 8 sublane rows (rows >= num_cls are unused zeros)
    cls = jnp.zeros((depth, 8, dim), jnp.float32)
    cls = cls.at[:, :num_cls, :].set(
        jax.random.normal(ks[1], (depth, num_cls, dim), jnp.float32))
    params["cls"] = cls
    # packed per-channel vectors, 8 rows each (sublane aligned, VMEM resident):
    #   vecd rows: [ln1_gamma, ln1_beta, b_o, ln2_gamma, ln2_beta, b_2, 0, 0]
    #   vecm rows: [b_1, 0, ...]
    vecd = jnp.zeros((depth * depth_block, 8, dim), jnp.float32)
    vecd = vecd.at[:, 0, :].set(1.0)     # ln1 gamma
    vecd = vecd.at[:, 3, :].set(1.0)     # ln2 gamma
    params["vecd"] = vecd
    params["vecm"] = jnp.zeros((depth * depth_block, 8, mlp_dim), jnp.float32)
    return params


# ----------------------------------------------------------------------------
# Forward: host side only draws randomness; everything else is in the kernel
# ----------------------------------------------------------------------------
def markov_mixed_gussan_forward(x, params, key, *, heads, dim_head,
                                depth, depth_block, mlp_dim, num_cls=2):
    batch, words, dim = x.shape
    inner = heads * dim_head
    n_tok = num_cls + words + 1
    n_tok_pad = ((n_tok + 7) // 8) * 8

    k_s, k_eps = jax.random.split(key)
    sample0 = (jax.random.normal(k_s, (batch, 1, dim), jnp.float32)
               + params["init_mu"])
    eps = jax.random.normal(k_eps, (depth, batch, 1, dim), jnp.float32)

    kernel = functools.partial(
        _fused_forward_kernel, words=words, num_cls=num_cls, heads=heads,
        dim_head=dim_head, depth=depth, depth_block=depth_block,
        n_tok=n_tok, n_tok_pad=n_tok_pad)

    def per_block(rows, cols):
        # weights stacked (depth, depth_block, rows, cols): pick slice (s, l)
        return pl.BlockSpec((None, None, rows, cols),
                            lambda b, s, l: (s, l, 0, 0))

    def resident(shape):
        # whole stacked array resident in VMEM; indexed by (s, l) in-kernel
        return pl.BlockSpec(shape, lambda b, s, l: (0,) * len(shape))

    grid_spec = pltpu.PrefetchScalarGridSpec(
        num_scalar_prefetch=0,
        grid=(batch, depth, depth_block),
        in_specs=[
            pl.BlockSpec((None, 1, dim), lambda b, s, l: (b, 0, 0)),      # sample0
            pl.BlockSpec((None, words, dim), lambda b, s, l: (b, 0, 0)),  # x
            pl.BlockSpec((None, None, 1, dim),
                         lambda b, s, l: (s, b, 0, 0)),                   # eps
            resident(params["cls"].shape),                                # cls
            per_block(dim, 3 * inner),                                    # wqkv
            per_block(inner, dim),                                        # wo
            per_block(dim, mlp_dim),                                      # w1
            per_block(mlp_dim, dim),                                      # w2
            resident(params["vecd"].shape),                               # vecd
            resident(params["vecm"].shape),                               # vecm
        ],
        out_specs=pl.BlockSpec((None, 2, dim), lambda b, s, l: (b, 0, 0)),
        scratch_shapes=[
            pltpu.VMEM((n_tok_pad, dim), jnp.float32),       # resident tokens
            pltpu.VMEM((1, dim), jnp.float32),               # carried sample
            pltpu.VMEM((n_tok_pad, 3 * inner), jnp.float32), # QKV staging
            pltpu.VMEM((n_tok_pad, inner), jnp.float32),     # attn-out staging
        ],
    )

    return pl.pallas_call(
        kernel,
        out_shape=jax.ShapeDtypeStruct((batch, 2, dim), jnp.float32),
        grid_spec=grid_spec,
        # batch rows are independent (parallel: second TC on v7x);
        # stage/block axes carry VMEM state -> sequential.
        compiler_params=pltpu.CompilerParams(
            dimension_semantics=("parallel", "arbitrary", "arbitrary"),
            vmem_limit_bytes=48 * 1024 * 1024),
    )(sample0, x, eps, params["cls"], params["wqkv"], params["wo"],
      params["w1"], params["w2"], params["vecd"], params["vecm"])


# ----------------------------------------------------------------------------
if __name__ == "__main__":
    # small but lane-aligned config (dim, inner, mlp_dim, dim_head all
    # multiples of 128 so every matmul output is lane dense); depth >= 2.
    words, dim = 8, 128
    depth_block, depth = 2, 2
    heads, dim_head, mlp_dim = 2, 128, 256
    batch = 2

    root = jax.random.PRNGKey(0)
    k_params, k_x, k_fwd = jax.random.split(root, 3)

    params = build_params(k_params, dim=dim, depth=depth,
                          depth_block=depth_block, heads=heads,
                          dim_head=dim_head, mlp_dim=mlp_dim)
    x = jax.random.normal(k_x, (batch, words, dim), jnp.float32)

    out = markov_mixed_gussan_forward(
        x, params, k_fwd, heads=heads, dim_head=dim_head,
        depth=depth, depth_block=depth_block, mlp_dim=mlp_dim)
    out = jax.block_until_ready(out)

    assert out.shape == (batch, 2, dim), out.shape
    assert bool(jnp.all(jnp.isfinite(out)))
    print("KERNEL_OK")
</pallas_src>

<mosaic_0001>
module attributes {stable_mosaic.version = 11 : i64} {
  func.func @_fused_forward_kernel(%arg0: i32, %arg1: i32, %arg2: i32, %arg3: memref<1x1x128xf32, #tpu.memory_space<vmem>>, %arg4: memref<1x8x128xf32, #tpu.memory_space<vmem>>, %arg5: memref<1x1x1x128xf32, #tpu.memory_space<vmem>>, %arg6: memref<2x8x128xf32, #tpu.memory_space<vmem>>, %arg7: memref<1x1x128x768xbf16, #tpu.memory_space<vmem>>, %arg8: memref<1x1x256x128xbf16, #tpu.memory_space<vmem>>, %arg9: memref<1x1x128x256xbf16, #tpu.memory_space<vmem>>, %arg10: memref<1x1x256x128xbf16, #tpu.memory_space<vmem>>, %arg11: memref<4x8x128xf32, #tpu.memory_space<vmem>>, %arg12: memref<4x8x256xf32, #tpu.memory_space<vmem>>, %arg13: memref<1x2x128xf32, #tpu.memory_space<vmem>>, %arg14: memref<16x128xf32, #tpu.memory_space<vmem>>, %arg15: memref<1x128xf32, #tpu.memory_space<vmem>>, %arg16: memref<16x768xf32, #tpu.memory_space<vmem>>, %arg17: memref<16x256xf32, #tpu.memory_space<vmem>>) attributes {dimension_semantics = [#tpu.dimension_semantics<parallel>, #tpu.dimension_semantics<arbitrary>, #tpu.dimension_semantics<arbitrary>], iteration_bounds = array<i64: 2, 2, 2>, scalar_prefetch = 0 : i64, scratch_operands = 4 : i64, tpu.core_type = #tpu.core_type<tc>, window_params = [{transform_indices = @transform_0, window_bounds = array<i64: 1, 1, 128>}, {transform_indices = @transform_1, window_bounds = array<i64: 1, 8, 128>}, {transform_indices = @transform_2, window_bounds = array<i64: 1, 1, 1, 128>}, {pipeline_mode = #tpu.pipeline_mode<synchronous>, transform_indices = @transform_3, window_bounds = array<i64: 2, 8, 128>}, {transform_indices = @transform_4, window_bounds = array<i64: 1, 1, 128, 768>}, {transform_indices = @transform_5, window_bounds = array<i64: 1, 1, 256, 128>}, {transform_indices = @transform_6, window_bounds = array<i64: 1, 1, 128, 256>}, {transform_indices = @transform_7, window_bounds = array<i64: 1, 1, 256, 128>}, {pipeline_mode = #tpu.pipeline_mode<synchronous>, transform_indices = @transform_8, window_bounds = array<i64: 4, 8, 128>}, {pipeline_mode = #tpu.pipeline_mode<synchronous>, transform_indices = @transform_9, window_bounds = array<i64: 4, 8, 256>}, {transform_indices = @transform_10, window_bounds = array<i64: 1, 2, 128>}]} {
    %c0_i32 = arith.constant 0 : i32
    %0 = arith.cmpi eq, %arg1, %c0_i32 : i32
    %c0_i32_0 = arith.constant 0 : i32
    %1 = arith.cmpi eq, %arg2, %c0_i32_0 : i32
    %2 = arith.andi %0, %1 : i1
    %3 = arith.extui %2 : i1 to i32
    %c0_i32_1 = arith.constant 0 : i32
    %4 = arith.cmpi ne, %3, %c0_i32_1 : i32
    scf.if %4 {
      %c0_79 = arith.constant 0 : index
      %c0_80 = arith.constant 0 : index
      %c0_81 = arith.constant 0 : index
      %169 = vector.load %arg3[%c0_79, %c0_80, %c0_81] : memref<1x1x128xf32, #tpu.memory_space<vmem>>, vector<1x1x128xf32>
      %170 = vector.shape_cast %169 : vector<1x1x128xf32> to vector<1x128xf32>
      %c0_82 = arith.constant 0 : index
      %c0_83 = arith.constant 0 : index
      %171 = vector.load %arg15[%c0_82, %c0_83] : memref<1x128xf32, #tpu.memory_space<vmem>>, vector<1x128xf32>
      tpu.vector_store %arg15[%c0_82, %c0_83], %170 {strides = array<i32>} : memref<1x128xf32, #tpu.memory_space<vmem>>, vector<1x128xf32>,
    } else {
    }
    %c0_i32_2 = arith.constant 0 : i32
    %5 = arith.cmpi eq, %arg2, %c0_i32_2 : i32
    %6 = arith.extui %5 : i1 to i32
    %c0_i32_3 = arith.constant 0 : i32
    %7 = arith.cmpi ne, %6, %c0_i32_3 : i32
    scf.if %7 {
      %cst_79 = arith.constant 0.000000e+00 : f32
      %169 = vector.broadcast %cst_79 : f32 to vector<16x128xf32>
      %c0_80 = arith.constant 0 : index
      %c0_81 = arith.constant 0 : index
      %170 = vector.load %arg14[%c0_80, %c0_81] : memref<16x128xf32, #tpu.memory_space<vmem>>, vector<16x128xf32>
      tpu.vector_store %arg14[%c0_80, %c0_81], %169 {strides = array<i32>} : memref<16x128xf32, #tpu.memory_space<vmem>>, vector<16x128xf32>,
      %171 = arith.index_cast %arg1 : i32 to index
      %c0_82 = arith.constant 0 : index
      %c0_83 = arith.constant 0 : index
      %172 = vector.load %arg6[%171, %c0_82, %c0_83] : memref<2x8x128xf32, #tpu.memory_space<vmem>>, vector<1x8x128xf32>
      %173 = vector.shape_cast %172 : vector<1x8x128xf32> to vector<8x128xf32>
      %174 = vector.extract_strided_slice %173 {offsets = [0, 0], sizes = [2, 128], strides = [1, 1]} : vector<8x128xf32> to vector<2x128xf32>
      %c0_84 = arith.constant 0 : index
      %c0_85 = arith.constant 0 : index
      %175 = vector.load %arg14[%c0_84, %c0_85] : memref<16x128xf32, #tpu.memory_space<vmem>>, vector<2x128xf32>
      tpu.vector_store %arg14[%c0_84, %c0_85], %174 {strides = array<i32>} : memref<16x128xf32, #tpu.memory_space<vmem>>, vector<2x128xf32>,
      %c0_86 = arith.constant 0 : index
      %c0_87 = arith.constant 0 : index
      %c0_88 = arith.constant 0 : index
      %176 = vector.load %arg4[%c0_86, %c0_87, %c0_88] : memref<1x8x128xf32, #tpu.memory_space<vmem>>, vector<1x8x128xf32>
      %177 = vector.shape_cast %176 : vector<1x8x128xf32> to vector<8x128xf32>
      %c2 = arith.constant 2 : index
      %c0_89 = arith.constant 0 : index
      %178 = vector.load %arg14[%c2, %c0_89] : memref<16x128xf32, #tpu.memory_space<vmem>>, vector<8x128xf32>
      tpu.vector_store %arg14[%c2, %c0_89], %177 {strides = array<i32>} : memref<16x128xf32, #tpu.memory_space<vmem>>, vector<8x128xf32>,
      %c0_90 = arith.constant 0 : index
      %c0_91 = arith.constant 0 : index
      %179 = vector.load %arg15[%c0_90, %c0_91] : memref<1x128xf32, #tpu.memory_space<vmem>>, vector<1x128xf32>
      %c10 = arith.constant 10 : index
      %c0_92 = arith.constant 0 : index
      %180 = vector.load %arg14[%c10, %c0_92] : memref<16x128xf32, #tpu.memory_space<vmem>>, vector<1x128xf32>
      tpu.vector_store %arg14[%c10, %c0_92], %179 {strides = array<i32>} : memref<16x128xf32, #tpu.memory_space<vmem>>, vector<1x128xf32>,
    } else {
    }
    %c2_i32 = arith.constant 2 : i32
    %8 = arith.muli %arg1, %c2_i32 : i32
    %9 = arith.addi %8, %arg2 : i32
    %10 = arith.index_cast %9 : i32 to index
    %c0 = arith.constant 0 : index
    %c0_4 = arith.constant 0 : index
    %11 = vector.load %arg11[%10, %c0, %c0_4] : memref<4x8x128xf32, #tpu.memory_space<vmem>>, vector<1x8x128xf32>
    %12 = vector.shape_cast %11 : vector<1x8x128xf32> to vector<8x128xf32>
    %13 = arith.index_cast %9 : i32 to index
    %c0_5 = arith.constant 0 : index
    %c0_6 = arith.constant 0 : index
    %14 = vector.load %arg12[%13, %c0_5, %c0_6] : memref<4x8x256xf32, #tpu.memory_space<vmem>>, vector<1x8x256xf32>
    %15 = vector.shape_cast %14 : vector<1x8x256xf32> to vector<8x256xf32>
    %16 = vector.extract_strided_slice %12 {offsets = [0, 0], sizes = [1, 128], strides = [1, 1]} : vector<8x128xf32> to vector<1x128xf32>
    %17 = vector.extract_strided_slice %12 {offsets = [1, 0], sizes = [1, 128], strides = [1, 1]} : vector<8x128xf32> to vector<1x128xf32>
    %18 = vector.extract_strided_slice %12 {offsets = [2, 0], sizes = [1, 128], strides = [1, 1]} : vector<8x128xf32> to vector<1x128xf32>
    %19 = vector.extract_strided_slice %12 {offsets = [3, 0], sizes = [1, 128], strides = [1, 1]} : vector<8x128xf32> to vector<1x128xf32>
    %20 = vector.extract_strided_slice %12 {offsets = [4, 0], sizes = [1, 128], strides = [1, 1]} : vector<8x128xf32> to vector<1x128xf32>
    %21 = vector.extract_strided_slice %12 {offsets = [5, 0], sizes = [1, 128], strides = [1, 1]} : vector<8x128xf32> to vector<1x128xf32>
    %22 = vector.extract_strided_slice %15 {offsets = [0, 0], sizes = [1, 256], strides = [1, 1]} : vector<8x256xf32> to vector<1x256xf32>
    %c0_7 = arith.constant 0 : index
    %c0_8 = arith.constant 0 : index
    %23 = vector.load %arg14[%c0_7, %c0_8] : memref<16x128xf32, #tpu.memory_space<vmem>>, vector<16x128xf32>
    %cst = arith.constant dense<0.000000e+00> : vector<16xf32>
    %24 = vector.multi_reduction <add>, %23, %cst [1] : vector<16x128xf32> to vector<16xf32>
    %25 = vector.shape_cast %24 : vector<16xf32> to vector<16x1xf32>
    %cst_9 = arith.constant 1.280000e+02 : f32
    %26 = vector.broadcast %cst_9 : f32 to vector<16x1xf32>
    %27 = arith.divf %25, %26 : vector<16x1xf32>
    %28 = vector.broadcast %27 : vector<16x1xf32> to vector<16x128xf32>
    %29 = arith.subf %23, %28 : vector<16x128xf32>
    %30 = arith.mulf %29, %29 : vector<16x128xf32>
    %cst_10 = arith.constant dense<0.000000e+00> : vector<16xf32>
    %31 = vector.multi_reduction <add>, %30, %cst_10 [1] : vector<16x128xf32> to vector<16xf32>
    %32 = vector.shape_cast %31 : vector<16xf32> to vector<16x1xf32>
    %cst_11 = arith.constant 1.280000e+02 : f32
    %33 = vector.broadcast %cst_11 : f32 to vector<16x1xf32>
    %34 = arith.divf %32, %33 : vector<16x1xf32>
    %35 = vector.broadcast %27 : vector<16x1xf32> to vector<16x128xf32>
    %36 = arith.subf %23, %35 : vector<16x128xf32>
    %cst_12 = arith.constant 9.99999974E-6 : f32
    %37 = vector.broadcast %cst_12 : f32 to vector<16x1xf32>
    %38 = arith.addf %34, %37 : vector<16x1xf32>
    %39 = math.rsqrt %38 : vector<16x1xf32>
    %40 = vector.broadcast %39 : vector<16x1xf32> to vector<16x128xf32>
    %41 = arith.mulf %36, %40 : vector<16x128xf32>
    %42 = vector.broadcast %16 : vector<1x128xf32> to vector<16x128xf32>
    %43 = arith.mulf %41, %42 : vector<16x128xf32>
    %44 = vector.broadcast %17 : vector<1x128xf32> to vector<16x128xf32>
    %45 = arith.addf %43, %44 : vector<16x128xf32>
    %46 = arith.truncf %45 : vector<16x128xf32> to vector<16x128xbf16>
    %c0_13 = arith.constant 0 : index
    %c0_14 = arith.constant 0 : index
    %c0_15 = arith.constant 0 : index
    %c0_16 = arith.constant 0 : index
    %47 = vector.load %arg7[%c0_13, %c0_14, %c0_15, %c0_16] : memref<1x1x128x768xbf16, #tpu.memory_space<vmem>>, vector<1x1x128x768xbf16>
    %48 = vector.shape_cast %47 : vector<1x1x128x768xbf16> to vector<128x768xbf16>
    %cst_17 = arith.constant dense<0.000000e+00> : vector<16x768xf32>
    %49 = tpu.matmul %46, %48, %cst_17 {dimension_numbers = #tpu.dot_dimension_numbers<[1], [0], [0], [1], [0, 0, 1, 1], [], []>} : vector<16x128xbf16>, vector<128x768xbf16>, vector<16x768xf32> -> vector<16x768xf32>
    %c0_18 = arith.constant 0 : index
    %c0_19 = arith.constant 0 : index
    %50 = vector.load %arg16[%c0_18, %c0_19] : memref<16x768xf32, #tpu.memory_space<vmem>>, vector<16x768xf32>
    tpu.vector_store %arg16[%c0_18, %c0_19], %49 {strides = array<i32>} : memref<16x768xf32, #tpu.memory_space<vmem>>, vector<16x768xf32>,
    %51 = tpu.iota {dimensions = array<i32: 1>} : vector<16x16xi32>
    %c11_i32 = arith.constant 11 : i32
    %52 = vector.broadcast %c11_i32 : i32 to vector<16x16xi32>
    %53 = arith.cmpi slt, %51, %52 : vector<16x16xi32>
    %c0_20 = arith.constant 0 : index
    %c0_21 = arith.constant 0 : index
    %54 = vector.load %arg16[%c0_20, %c0_21] : memref<16x768xf32, #tpu.memory_space<vmem>>, vector<16x128xf32>
    %55 = arith.truncf %54 : vector<16x128xf32> to vector<16x128xbf16>
    %c0_22 = arith.constant 0 : index
    %c256 = arith.constant 256 : index
    %56 = vector.load %arg16[%c0_22, %c256] : memref<16x768xf32, #tpu.memory_space<vmem>>, vector<16x128xf32>
    %57 = arith.truncf %56 : vector<16x128xf32> to vector<16x128xbf16>
    %c0_23 = arith.constant 0 : index
    %c512 = arith.constant 512 : index
    %58 = vector.load %arg16[%c0_23, %c512] : memref<16x768xf32, #tpu.memory_space<vmem>>, vector<16x128xf32>
    %59 = arith.truncf %58 : vector<16x128xf32> to vector<16x128xbf16>
    %cst_24 = arith.constant dense<0.000000e+00> : vector<16x16xf32>
    %60 = tpu.matmul %55, %57, %cst_24 {dimension_numbers = #tpu.dot_dimension_numbers<[1], [1], [0], [0], [0, 0, 1, 0], [], []>} : vector<16x128xbf16>, vector<16x128xbf16>, vector<16x16xf32> -> vector<16x16xf32>
    %cst_25 = arith.constant 0.0883883461 : f32
    %61 = vector.broadcast %cst_25 : f32 to vector<16x16xf32>
    %62 = arith.mulf %60, %61 : vector<16x16xf32>
    %cst_26 = arith.constant -1.000000e+30 : f32
    %63 = vector.broadcast %cst_26 : f32 to vector<16x16xf32>
    %64 = arith.select %53, %62, %63 : vector<16x16xi1>, vector<16x16xf32>
    %cst_27 = arith.constant dense<0xFF800000> : vector<16xf32>
    %65 = vector.multi_reduction <maximumf>, %64, %cst_27 [1] : vector<16x16xf32> to vector<16xf32>
    %66 = vector.shape_cast %65 : vector<16xf32> to vector<16x1xf32>
    %67 = vector.broadcast %66 : vector<16x1xf32> to vector<16x16xf32>
    %68 = arith.subf %64, %67 : vector<16x16xf32>
    %69 = math.exp %68 : vector<16x16xf32>
    %cst_28 = arith.constant dense<0.000000e+00> : vector<16xf32>
    %70 = vector.multi_reduction <add>, %69, %cst_28 [1] : vector<16x16xf32> to vector<16xf32>
    %71 = vector.shape_cast %70 : vector<16xf32> to vector<16x1xf32>
    %72 = tpu.reciprocal %71 {approx = true} : vector<16x1xf32> -> vector<16x1xf32>
    %73 = vector.broadcast %72 : vector<16x1xf32> to vector<16x16xf32>
    %74 = arith.mulf %69, %73 : vector<16x16xf32>
    %75 = arith.truncf %74 : vector<16x16xf32> to vector<16x16xbf16>
    %cst_29 = arith.constant dense<0.000000e+00> : vector<16x128xf32>
    %76 = tpu.matmul %75, %59, %cst_29 {dimension_numbers = #tpu.dot_dimension_numbers<[1], [0], [0], [1], [0, 0, 1, 1], [], []>} : vector<16x16xbf16>, vector<16x128xbf16>, vector<16x128xf32> -> vector<16x128xf32>
    %c0_30 = arith.constant 0 : index
    %c0_31 = arith.constant 0 : index
    %77 = vector.load %arg17[%c0_30, %c0_31] : memref<16x256xf32, #tpu.memory_space<vmem>>, vector<16x128xf32>
    tpu.vector_store %arg17[%c0_30, %c0_31], %76 {strides = array<i32>} : memref<16x256xf32, #tpu.memory_space<vmem>>, vector<16x128xf32>,
    %c0_32 = arith.constant 0 : index
    %c128 = arith.constant 128 : index
    %78 = vector.load %arg16[%c0_32, %c128] : memref<16x768xf32, #tpu.memory_space<vmem>>, vector<16x128xf32>
    %79 = arith.truncf %78 : vector<16x128xf32> to vector<16x128xbf16>
    %c0_33 = arith.constant 0 : index
    %c384 = arith.constant 384 : index
    %80 = vector.load %arg16[%c0_33, %c384] : memref<16x768xf32, #tpu.memory_space<vmem>>, vector<16x128xf32>
    %81 = arith.truncf %80 : vector<16x128xf32> to vector<16x128xbf16>
    %c0_34 = arith.constant 0 : index
    %c640 = arith.constant 640 : index
    %82 = vector.load %arg16[%c0_34, %c640] : memref<16x768xf32, #tpu.memory_space<vmem>>, vector<16x128xf32>
    %83 = arith.truncf %82 : vector<16x128xf32> to vector<16x128xbf16>
    %cst_35 = arith.constant dense<0.000000e+00> : vector<16x16xf32>
    %84 = tpu.matmul %79, %81, %cst_35 {dimension_numbers = #tpu.dot_dimension_numbers<[1], [1], [0], [0], [0, 0, 1, 0], [], []>} : vector<16x128xbf16>, vector<16x128xbf16>, vector<16x16xf32> -> vector<16x16xf32>
    %cst_36 = arith.constant 0.0883883461 : f32
    %85 = vector.broadcast %cst_36 : f32 to vector<16x16xf32>
    %86 = arith.mulf %84, %85 : vector<16x16xf32>
    %cst_37 = arith.constant -1.000000e+30 : f32
    %87 = vector.broadcast %cst_37 : f32 to vector<16x16xf32>
    %88 = arith.select %53, %86, %87 : vector<16x16xi1>, vector<16x16xf32>
    %cst_38 = arith.constant dense<0xFF800000> : vector<16xf32>
    %89 = vector.multi_reduction <maximumf>, %88, %cst_38 [1] : vector<16x16xf32> to vector<16xf32>
    %90 = vector.shape_cast %89 : vector<16xf32> to vector<16x1xf32>
    %91 = vector.broadcast %90 : vector<16x1xf32> to vector<16x16xf32>
    %92 = arith.subf %88, %91 : vector<16x16xf32>
    %93 = math.exp %92 : vector<16x16xf32>
    %cst_39 = arith.constant dense<0.000000e+00> : vector<16xf32>
    %94 = vector.multi_reduction <add>, %93, %cst_39 [1] : vector<16x16xf32> to vector<16xf32>
    %95 = vector.shape_cast %94 : vector<16xf32> to vector<16x1xf32>
    %96 = tpu.reciprocal %95 {approx = true} : vector<16x1xf32> -> vector<16x1xf32>
    %97 = vector.broadcast %96 : vector<16x1xf32> to vector<16x16xf32>
    %98 = arith.mulf %93, %97 : vector<16x16xf32>
    %99 = arith.truncf %98 : vector<16x16xf32> to vector<16x16xbf16>
    %cst_40 = arith.constant dense<0.000000e+00> : vector<16x128xf32>
    %100 = tpu.matmul %99, %83, %cst_40 {dimension_numbers = #tpu.dot_dimension_numbers<[1], [0], [0], [1], [0, 0, 1, 1], [], []>} : vector<16x16xbf16>, vector<16x128xbf16>, vector<16x128xf32> -> vector<16x128xf32>
    %c0_41 = arith.constant 0 : index
    %c128_42 = arith.constant 128 : index
    %101 = vector.load %arg17[%c0_41, %c128_42] : memref<16x256xf32, #tpu.memory_space<vmem>>, vector<16x128xf32>
    tpu.vector_store %arg17[%c0_41, %c128_42], %100 {strides = array<i32>} : memref<16x256xf32, #tpu.memory_space<vmem>>, vector<16x128xf32>,
    %c0_43 = arith.constant 0 : index
    %c0_44 = arith.constant 0 : index
    %102 = vector.load %arg17[%c0_43, %c0_44] : memref<16x256xf32, #tpu.memory_space<vmem>>, vector<16x256xf32>
    %103 = arith.truncf %102 : vector<16x256xf32> to vector<16x256xbf16>
    %c0_45 = arith.constant 0 : index
    %c0_46 = arith.constant 0 : index
    %c0_47 = arith.constant 0 : index
    %c0_48 = arith.constant 0 : index
    %104 = vector.load %arg8[%c0_45, %c0_46, %c0_47, %c0_48] : memref<1x1x256x128xbf16, #tpu.memory_space<vmem>>, vector<1x1x256x128xbf16>
    %105 = vector.shape_cast %104 : vector<1x1x256x128xbf16> to vector<256x128xbf16>
    %cst_49 = arith.constant dense<0.000000e+00> : vector<16x128xf32>
    %106 = tpu.matmul %103, %105, %cst_49 {dimension_numbers = #tpu.dot_dimension_numbers<[1], [0], [0], [1], [0, 0, 1, 1], [], []>} : vector<16x256xbf16>, vector<256x128xbf16>, vector<16x128xf32> -> vector<16x128xf32>
    %107 = vector.broadcast %18 : vector<1x128xf32> to vector<16x128xf32>
    %108 = arith.addf %106, %107 : vector<16x128xf32>
    %109 = arith.addf %23, %108 : vector<16x128xf32>
    %c0_50 = arith.constant 0 : index
    %c0_51 = arith.constant 0 : index
    %110 = vector.load %arg14[%c0_50, %c0_51] : memref<16x128xf32, #tpu.memory_space<vmem>>, vector<16x128xf32>
    tpu.vector_store %arg14[%c0_50, %c0_51], %109 {strides = array<i32>} : memref<16x128xf32, #tpu.memory_space<vmem>>, vector<16x128xf32>,
    %c0_52 = arith.constant 0 : index
    %c0_53 = arith.constant 0 : index
    %111 = vector.load %arg14[%c0_52, %c0_53] : memref<16x128xf32, #tpu.memory_space<vmem>>, vector<16x128xf32>
    %cst_54 = arith.constant dense<0.000000e+00> : vector<16xf32>
    %112 = vector.multi_reduction <add>, %111, %cst_54 [1] : vector<16x128xf32> to vector<16xf32>
    %113 = vector.shape_cast %112 : vector<16xf32> to vector<16x1xf32>
    %cst_55 = arith.constant 1.280000e+02 : f32
    %114 = vector.broadcast %cst_55 : f32 to vector<16x1xf32>
    %115 = arith.divf %113, %114 : vector<16x1xf32>
    %116 = vector.broadcast %115 : vector<16x1xf32> to vector<16x128xf32>
    %117 = arith.subf %111, %116 : vector<16x128xf32>
    %118 = arith.mulf %117, %117 : vector<16x128xf32>
    %cst_56 = arith.constant dense<0.000000e+00> : vector<16xf32>
    %119 = vector.multi_reduction <add>, %118, %cst_56 [1] : vector<16x128xf32> to vector<16xf32>
    %120 = vector.shape_cast %119 : vector<16xf32> to vector<16x1xf32>
    %cst_57 = arith.constant 1.280000e+02 : f32
    %121 = vector.broadcast %cst_57 : f32 to vector<16x1xf32>
    %122 = arith.divf %120, %121 : vector<16x1xf32>
    %123 = vector.broadcast %115 : vector<16x1xf32> to vector<16x128xf32>
    %124 = arith.subf %111, %123 : vector<16x128xf32>
    %cst_58 = arith.constant 9.99999974E-6 : f32
    %125 = vector.broadcast %cst_58 : f32 to vector<16x1xf32>
    %126 = arith.addf %122, %125 : vector<16x1xf32>
    %127 = math.rsqrt %126 : vector<16x1xf32>
    %128 = vector.broadcast %127 : vector<16x1xf32> to vector<16x128xf32>
    %129 = arith.mulf %124, %128 : vector<16x128xf32>
    %130 = vector.broadcast %19 : vector<1x128xf32> to vector<16x128xf32>
    %131 = arith.mulf %129, %130 : vector<16x128xf32>
    %132 = vector.broadcast %20 : vector<1x128xf32> to vector<16x128xf32>
    %133 = arith.addf %131, %132 : vector<16x128xf32>
    %134 = arith.truncf %133 : vector<16x128xf32> to vector<16x128xbf16>
    %c0_59 = arith.constant 0 : index
    %c0_60 = arith.constant 0 : index
    %c0_61 = arith.constant 0 : index
    %c0_62 = arith.constant 0 : index
    %135 = vector.load %arg9[%c0_59, %c0_60, %c0_61, %c0_62] : memref<1x1x128x256xbf16, #tpu.memory_space<vmem>>, vector<1x1x128x256xbf16>
    %136 = vector.shape_cast %135 : vector<1x1x128x256xbf16> to vector<128x256xbf16>
    %cst_63 = arith.constant dense<0.000000e+00> : vector<16x256xf32>
    %137 = tpu.matmul %134, %136, %cst_63 {dimension_numbers = #tpu.dot_dimension_numbers<[1], [0], [0], [1], [0, 0, 1, 1], [], []>} : vector<16x128xbf16>, vector<128x256xbf16>, vector<16x256xf32> -> vector<16x256xf32>
    %138 = vector.broadcast %22 : vector<1x256xf32> to vector<16x256xf32>
    %139 = arith.addf %137, %138 : vector<16x256xf32>
    %140 = arith.mulf %139, %139 : vector<16x256xf32>
    %141 = arith.mulf %139, %140 : vector<16x256xf32>
    %cst_64 = arith.constant 4.471500e-02 : f32
    %142 = vector.broadcast %cst_64 : f32 to vector<16x256xf32>
    %143 = arith.mulf %142, %141 : vector<16x256xf32>
    %144 = arith.addf %139, %143 : vector<16x256xf32>
    %cst_65 = arith.constant 0.797884583 : f32
    %145 = vector.broadcast %cst_65 : f32 to vector<16x256xf32>
    %146 = arith.mulf %145, %144 : vector<16x256xf32>
    %147 = math.tanh %146 : vector<16x256xf32>
    %cst_66 = arith.constant 1.000000e+00 : f32
    %148 = vector.broadcast %cst_66 : f32 to vector<16x256xf32>
    %149 = arith.addf %148, %147 : vector<16x256xf32>
    %cst_67 = arith.constant 5.000000e-01 : f32
    %150 = vector.broadcast %cst_67 : f32 to vector<16x256xf32>
    %151 = arith.mulf %150, %149 : vector<16x256xf32>
    %152 = arith.mulf %139, %151 : vector<16x256xf32>
    %153 = arith.truncf %152 : vector<16x256xf32> to vector<16x256xbf16>
    %c0_68 = arith.constant 0 : index
    %c0_69 = arith.constant 0 : index
    %c0_70 = arith.constant 0 : index
    %c0_71 = arith.constant 0 : index
    %154 = vector.load %arg10[%c0_68, %c0_69, %c0_70, %c0_71] : memref<1x1x256x128xbf16, #tpu.memory_space<vmem>>, vector<1x1x256x128xbf16>
    %155 = vector.shape_cast %154 : vector<1x1x256x128xbf16> to vector<256x128xbf16>
    %cst_72 = arith.constant dense<0.000000e+00> : vector<16x128xf32>
    %156 = tpu.matmul %153, %155, %cst_72 {dimension_numbers = #tpu.dot_dimension_numbers<[1], [0], [0], [1], [0, 0, 1, 1], [], []>} : vector<16x256xbf16>, vector<256x128xbf16>, vector<16x128xf32> -> vector<16x128xf32>
    %157 = vector.broadcast %21 : vector<1x128xf32> to vector<16x128xf32>
    %158 = arith.addf %156, %157 : vector<16x128xf32>
    %159 = arith.addf %111, %158 : vector<16x128xf32>
    %c0_73 = arith.constant 0 : index
    %c0_74 = arith.constant 0 : index
    %160 = vector.load %arg14[%c0_73, %c0_74] : memref<16x128xf32, #tpu.memory_space<vmem>>, vector<16x128xf32>
    tpu.vector_store %arg14[%c0_73, %c0_74], %159 {strides = array<i32>} : memref<16x128xf32, #tpu.memory_space<vmem>>, vector<16x128xf32>,
    %c1_i32 = arith.constant 1 : i32
    %161 = arith.cmpi eq, %arg2, %c1_i32 : i32
    %162 = arith.extui %161 : i1 to i32
    %c0_i32_75 = arith.constant 0 : i32
    %163 = arith.cmpi ne, %162, %c0_i32_75 : i32
    scf.if %163 {
      %c0_79 = arith.constant 0 : index
      %c0_80 = arith.constant 0 : index
      %169 = vector.load %arg14[%c0_79, %c0_80] : memref<16x128xf32, #tpu.memory_space<vmem>>, vector<8x128xf32>
      %170 = vector.extract_strided_slice %169 {offsets = [0, 0], sizes = [1, 128], strides = [1, 1]} : vector<8x128xf32> to vector<1x128xf32>
      %171 = vector.extract_strided_slice %169 {offsets = [1, 0], sizes = [1, 128], strides = [1, 1]} : vector<8x128xf32> to vector<1x128xf32>
      %cst_81 = arith.constant 5.000000e-01 : f32
      %172 = vector.broadcast %cst_81 : f32 to vector<1x128xf32>
      %173 = arith.mulf %172, %171 : vector<1x128xf32>
      %174 = math.exp %173 : vector<1x128xf32>
      %c0_82 = arith.constant 0 : index
      %c0_83 = arith.constant 0 : index
      %c0_84 = arith.constant 0 : index
      %c0_85 = arith.constant 0 : index
      %175 = vector.load %arg5[%c0_82, %c0_83, %c0_84, %c0_85] : memref<1x1x1x128xf32, #tpu.memory_space<vmem>>, vector<1x1x1x128xf32>
      %176 = vector.shape_cast %175 : vector<1x1x1x128xf32> to vector<1x128xf32>
      %177 = math.tanh %174 : vector<1x128xf32>
      %178 = arith.mulf %176, %177 : vector<1x128xf32>
      %179 = arith.addf %170, %178 : vector<1x128xf32>
      %c0_86 = arith.constant 0 : index
      %c0_87 = arith.constant 0 : index
      %180 = vector.load %arg15[%c0_86, %c0_87] : memref<1x128xf32, #tpu.memory_space<vmem>>, vector<1x128xf32>
      tpu.vector_store %arg15[%c0_86, %c0_87], %179 {strides = array<i32>} : memref<1x128xf32, #tpu.memory_space<vmem>>, vector<1x128xf32>,
    } else {
    }
    %c1_i32_76 = arith.constant 1 : i32
    %164 = arith.cmpi eq, %arg1, %c1_i32_76 : i32
    %c1_i32_77 = arith.constant 1 : i32
    %165 = arith.cmpi eq, %arg2, %c1_i32_77 : i32
    %166 = arith.andi %164, %165 : i1
    %167 = arith.extui %166 : i1 to i32
    %c0_i32_78 = arith.constant 0 : i32
    %168 = arith.cmpi ne, %167, %c0_i32_78 : i32
    scf.if %168 {
      %c0_79 = arith.constant 0 : index
      %c0_80 = arith.constant 0 : index
      %169 = vector.load %arg14[%c0_79, %c0_80] : memref<16x128xf32, #tpu.memory_space<vmem>>, vector<2x128xf32>
      %c0_81 = arith.constant 0 : index
      %c0_82 = arith.constant 0 : index
      %c0_83 = arith.constant 0 : index
      %170 = vector.load %arg13[%c0_81, %c0_82, %c0_83] : memref<1x2x128xf32, #tpu.memory_space<vmem>>, vector<1x2x128xf32>
      %171 = vector.shape_cast %170 : vector<1x2x128xf32> to vector<2x128xf32>
      %172 = vector.shape_cast %169 : vector<2x128xf32> to vector<1x2x128xf32>
      tpu.vector_store %arg13[%c0_81, %c0_82, %c0_83], %172 {strides = array<i32>} : memref<1x2x128xf32, #tpu.memory_space<vmem>>, vector<1x2x128xf32>,
    } else {
    }
    return
  }
  func.func @transform_0(%arg0: i32, %arg1: i32, %arg2: i32) -> (i32, i32, i32) {
    %c0_i32 = arith.constant 0 : i32
    %c0_i32_0 = arith.constant 0 : i32
    %c0_i32_1 = arith.constant 0 : i32
    return %arg0, %c0_i32, %c0_i32_0 : i32, i32, i32
  }
  func.func @transform_1(%arg0: i32, %arg1: i32, %arg2: i32) -> (i32, i32, i32) {
    %c0_i32 = arith.constant 0 : i32
    %c0_i32_0 = arith.constant 0 : i32
    %c0_i32_1 = arith.constant 0 : i32
    return %arg0, %c0_i32, %c0_i32_0 : i32, i32, i32
  }
  func.func @transform_2(%arg0: i32, %arg1: i32, %arg2: i32) -> (i32, i32, i32, i32) {
    %c0_i32 = arith.constant 0 : i32
    %c0_i32_0 = arith.constant 0 : i32
    %c0_i32_1 = arith.constant 0 : i32
    return %arg1, %arg0, %c0_i32, %c0_i32_0 : i32, i32, i32, i32
  }
  func.func @transform_3(%arg0: i32, %arg1: i32, %arg2: i32) -> (i32, i32, i32) {
    %c0_i32 = arith.constant 0 : i32
    %c0_i32_0 = arith.constant 0 : i32
    %c0_i32_1 = arith.constant 0 : i32
    %c0_i32_2 = arith.constant 0 : i32
    return %c0_i32, %c0_i32_0, %c0_i32_1 : i32, i32, i32
  }
  func.func @transform_4(%arg0: i32, %arg1: i32, %arg2: i32) -> (i32, i32, i32, i32) {
    %c0_i32 = arith.constant 0 : i32
    %c0_i32_0 = arith.constant 0 : i32
    %c0_i32_1 = arith.constant 0 : i32
    return %arg1, %arg2, %c0_i32, %c0_i32_0 : i32, i32, i32, i32
  }
  func.func @transform_5(%arg0: i32, %arg1: i32, %arg2: i32) -> (i32, i32, i32, i32) {
    %c0_i32 = arith.constant 0 : i32
    %c0_i32_0 = arith.constant 0 : i32
    %c0_i32_1 = arith.constant 0 : i32
    return %arg1, %arg2, %c0_i32, %c0_i32_0 : i32, i32, i32, i32
  }
  func.func @transform_6(%arg0: i32, %arg1: i32, %arg2: i32) -> (i32, i32, i32, i32) {
    %c0_i32 = arith.constant 0 : i32
    %c0_i32_0 = arith.constant 0 : i32
    %c0_i32_1 = arith.constant 0 : i32
    return %arg1, %arg2, %c0_i32, %c0_i32_0 : i32, i32, i32, i32
  }
  func.func @transform_7(%arg0: i32, %arg1: i32, %arg2: i32) -> (i32, i32, i32, i32) {
    %c0_i32 = arith.constant 0 : i32
    %c0_i32_0 = arith.constant 0 : i32
    %c0_i32_1 = arith.constant 0 : i32
    return %arg1, %arg2, %c0_i32, %c0_i32_0 : i32, i32, i32, i32
  }
  func.func @transform_8(%arg0: i32, %arg1: i32, %arg2: i32) -> (i32, i32, i32) {
    %c0_i32 = arith.constant 0 : i32
    %c0_i32_0 = arith.constant 0 : i32
    %c0_i32_1 = arith.constant 0 : i32
    %c0_i32_2 = arith.constant 0 : i32
    return %c0_i32, %c0_i32_0, %c0_i32_1 : i32, i32, i32
  }
  func.func @transform_9(%arg0: i32, %arg1: i32, %arg2: i32) -> (i32, i32, i32) {
    %c0_i32 = arith.constant 0 : i32
    %c0_i32_0 = arith.constant 0 : i32
    %c0_i32_1 = arith.constant 0 : i32
    %c0_i32_2 = arith.constant 0 : i32
    return %c0_i32, %c0_i32_0, %c0_i32_1 : i32, i32, i32
  }
  func.func @transform_10(%arg0: i32, %arg1: i32, %arg2: i32) -> (i32, i32, i32) {
    %c0_i32 = arith.constant 0 : i32
    %c0_i32_0 = arith.constant 0 : i32
    %c0_i32_1 = arith.constant 0 : i32
    return %arg0, %c0_i32, %c0_i32_0 : i32, i32, i32
  }
}

</mosaic_0001>

<llo_original>
// kernel: tpu_custom_call.1
$region0: #{tpu_custom_call.1}
  #allocation0 [shape = 'u32[]', space=smem, size = 0x4, offset = 0x4, fixed_abs, tag = 'smem constant byte address 0x4 - core index']
  #allocation1 [shape = 'u32[144,128]{1,0:T(1,128)}', space=vmem, size = 0x12000, scoped, tag = 'internal scratch']
  #allocation2 [shape = 'f32[16,128]{1,0:T(8,128)}', space=vmem, size = 0x2000, scoped, tag = 'scratch operand']
  #allocation3 [shape = 'f32[1,128]{1,0:T(1,128)}', space=vmem, size = 0x200, scoped, tag = 'scratch operand']
  #allocation4 [shape = 'f32[16,768]{1,0:T(8,128)}', space=vmem, size = 0xc000, scoped, tag = 'scratch operand']
  #allocation5 [shape = 'f32[16,256]{1,0:T(8,128)}', space=vmem, size = 0x4000, scoped, tag = 'scratch operand']
  %s0 = inlined_call_operand.hbm [shape: f32[2,1,128], index: 0, kind: input, shape index: {}]
  %s1 = inlined_call_operand.hbm [shape: f32[2,8,128], index: 1, kind: input, shape index: {}]
  %s2 = inlined_call_operand.vmem [shape: f32[2,2,1,128], index: 2, kind: input, shape index: {}]
  %s3 = inlined_call_operand.hbm [shape: f32[2,8,128], index: 3, kind: input, shape index: {}]
  %s4 = inlined_call_operand.hbm [shape: bf16[2,2,128,768], index: 4, kind: input, shape index: {}]
  %s5 = inlined_call_operand.hbm [shape: bf16[2,2,256,128], index: 5, kind: input, shape index: {}]
  %s6 = inlined_call_operand.hbm [shape: bf16[2,2,128,256], index: 6, kind: input, shape index: {}]
  %s7 = inlined_call_operand.hbm [shape: bf16[2,2,256,128], index: 7, kind: input, shape index: {}]
  %s8 = inlined_call_operand.hbm [shape: f32[4,8,128], index: 8, kind: input, shape index: {}]
  %s9 = inlined_call_operand.hbm [shape: f32[4,8,256], index: 9, kind: input, shape index: {}]
  %s10 = inlined_call_operand.hbm [shape: f32[2,2,128], index: 10, kind: output, shape index: {}]
  %s11 = sld [smem:[#allocation0]]
  $region125: #{tpu_custom_call.1} parent=0
    _
  %s13 = ssub.s32 1, %s11
  %s14 = scalar_select 0, %s13, %s11
  $region1: #{tpu_custom_call.1} parent=0
    #allocation6 [shape = 'u8[1024]{0}', space=vmem, size = 0x400, scoped, tag = 'input window, operand 0']
    #allocation7 [shape = 's32[2]{0}', space=sflag, size = 0x8, scoped, tag = 'scoped memory for tpu_custom_call.1']
    #allocation8 [shape = 's32[2]{0}', space=sflag, size = 0x8, scoped, tag = 'scoped memory for tpu_custom_call.1']
    #allocation9 [shape = 'u8[8192]{0}', space=vmem, size = 0x2000, scoped, tag = 'input window, operand 1']
    #allocation10 [shape = 's32[2]{0}', space=sflag, size = 0x8, scoped, tag = 'scoped memory for tpu_custom_call.1']
    #allocation11 [shape = 'u8[8192]{0}', space=vmem, size = 0x2000, scoped, tag = 'input window, operand 3, single buffered']
    #allocation12 [shape = 'u8[393216]{0}', space=vmem, size = 0x60000, scoped, tag = 'input window, operand 4']
    #allocation13 [shape = 's32[2]{0}', space=sflag, size = 0x8, scoped, tag = 'scoped memory for tpu_custom_call.1']
    #allocation14 [shape = 'u8[131072]{0}', space=vmem, size = 0x20000, scoped, tag = 'input window, operand 5']
    #allocation15 [shape = 'u8[131072]{0}', space=vmem, size = 0x20000, scoped, tag = 'input window, operand 6']
    #allocation16 [shape = 's32[2]{0}', space=sflag, size = 0x8, scoped, tag = 'scoped memory for tpu_custom_call.1']
    #allocation17 [shape = 'u8[131072]{0}', space=vmem, size = 0x20000, scoped, tag = 'input window, operand 7']
    #allocation18 [shape = 'u8[16384]{0}', space=vmem, size = 0x4000, scoped, tag = 'input window, operand 8, single buffered']
    #allocation19 [shape = 's32[1]{0}', space=sflag, size = 0x4, scoped, tag = 'scoped memory for tpu_custom_call.1']
    #allocation20 [shape = 'u8[32768]{0}', space=vmem, size = 0x8000, scoped, tag = 'input window, operand 9, single buffered']
    #allocation21 [shape = 'u8[2048]{0}', space=vmem, size = 0x800, scoped, tag = 'output window, operand 0']
    %15 = vsyncpa [#allocation7], 0
    %s16 = scalar_lea.sflag [#allocation7], 1
    %17 = vsyncpa %s16, 0
    %18 = vsyncpa [#allocation10], 0
    %s19 = scalar_lea.sflag [#allocation10], 1
    %20 = vsyncpa %s19, 0
    %21 = vsyncpa [#allocation13], 0
    %s22 = scalar_lea.sflag [#allocation13], 1
    %23 = vsyncpa %s22, 0
    %24 = vsyncpa [#allocation16], 0
    %s25 = scalar_lea.sflag [#allocation16], 1
    %26 = vsyncpa %s25, 0
    %27 = vsyncpa [#allocation19], 0
    %28 = vsyncpa [#allocation8], 0
    %s29 = scalar_lea.sflag [#allocation8], 1
    %30 = vsyncpa %s29, 0
    loop: start=0, step=1, limit=10
    $region2: #{tpu_custom_call.1} parent=1 // loop_pre_header
      _
    $region3: #{tpu_custom_call.1} parent=1 // loop_header
      %s32 = sphi 0, %s36
      %p33 = scmp.ge.s32.totalorder %s32, 10
      %s39 = sphi 0, %s58
      %s40 = sphi 0, %s54
      %s41 = sphi 0, %s50
      %s42 = sphi 0, %s39
      %s43 = sphi 0, %s40
      %s44 = sphi 0, %s41
      %s45 = sphi 0, %s42
      %s46 = sphi 0, %s43
      %s47 = sphi 0, %s44
      %s61 = sphi 0, %s63
      %s64 = sphi 0, %s61
      %s65 = sphi 0, %s64
      %s81 = sphi 0, %s65
      %s87 = sphi 0, %s89
      %s90 = sphi 0, %s87
      %s91 = sphi 0, %s90
      %s107 = sphi 0, %s91
      %s115 = sphi 0, %s117
      %s118 = sphi 0, %s115
      %s119 = sphi 0, %s118
      %s135 = sphi 0, %s119
      %s139 = sphi 0, %s139
      %s141 = sphi 0, %s139
      %s142 = sphi 0, %s141
      %s156 = sphi 0, %s142
      %s164 = sphi 0, %s166
      %s167 = sphi 0, %s164
      %s168 = sphi 0, %s167
      %s184 = sphi 0, %s168
      %s192 = sphi 0, %s194
      %s195 = sphi 0, %s192
      %s196 = sphi 0, %s195
      %s212 = sphi 0, %s196
      %s220 = sphi 0, %s222
      %s223 = sphi 0, %s220
      %s224 = sphi 0, %s223
      %s240 = sphi 0, %s224
      %s248 = sphi 0, %s250
      %s251 = sphi 0, %s248
      %s252 = sphi 0, %s251
      %s268 = sphi 0, %s252
      %s272 = sphi 0, %s272
      %s274 = sphi 0, %s272
      %s275 = sphi 0, %s274
      %s289 = sphi 0, %s275
      %s293 = sphi 0, %s293
      %s295 = sphi 0, %s293
      %s296 = sphi 0, %s295
      %s310 = sphi 0, %s296
      %s316 = sphi 0, %s318
      %s319 = sphi 0, %s316
      %s320 = sphi 0, %s319
      %s336 = sphi 0, %s320
    $region4: #{tpu_custom_call.1} parent=1 // loop_header_branch
      %35 = sbr.rel (%p33) target = $region8
    $region5: #{tpu_custom_call.1} parent=1 // loop_body
      %s37 = ssub.s32 %s32, 1
      %s38 = ssub.s32 %s32, 2
      %s48 = sadd.s32 1, %s41
      %p49 = scmp.ge.s32.totalorder %s48, 2
      %s50 = scalar_select %p49, 0, %s48
      %s51 = sadd.s32 1, %s40
      %s52 = scalar_select %p49, %s51, %s40
      %p53 = scmp.ge.s32.totalorder %s52, 2
      %s54 = scalar_select %p53, 0, %s52
      %s55 = sadd.s32 1, %s39
      %s56 = scalar_select %p53, %s55, %s39
      %p57 = scmp.ge.s32.totalorder %s56, 2
      %s58 = scalar_select %p57, 0, %s56
      %s59 = ssub.s32 %s39, %s58
      %p60 = scmp.eq.s32.totalorder %s59, 0
      %s62 = sadd.s32 %s61, 1
      %s63 = scalar_select %p60, %s61, %s62
      %p66 = pneg %p60
      %p67 = scmp.eq.s32.totalorder %s32, 7
      %p68 = por %p66, %p67
      %p69 = scmp.ne.s32.totalorder %s61, %s64
      %p70 = scmp.eq.s32.totalorder %s32, 0
      %p71 = por %p69, %p70
      %p72 = scmp.ne.s32.totalorder %s61, %s64
      %p73 = scmp.eq.s32.totalorder %s37, 7
      %p74 = por %p72, %p73
      %p75 = scmp.ne.s32.totalorder %s64, %s65
      %p76 = scmp.eq.s32.totalorder %s37, 0
      %p77 = por %p75, %p76
      %p78 = scmp.ne.s32.totalorder %s64, %s65
      %p79 = scmp.eq.s32.totalorder %s38, 7
      %p80 = por %p78, %p79
      %p82 = scmp.ne.s32.totalorder %s65, %s81
      %p83 = scmp.eq.s32.totalorder %s38, 0
      %p84 = por %p82, %p83
      %s85 = ssub.s32 %s39, %s58
      %p86 = scmp.eq.s32.totalorder %s85, 0
      %s88 = sadd.s32 %s87, 1
      %s89 = scalar_select %p86, %s87, %s88
      %p92 = pneg %p86
      %p93 = scmp.eq.s32.totalorder %s32, 7
      %p94 = por %p92, %p93
      %p95 = scmp.ne.s32.totalorder %s87, %s90
      %p96 = scmp.eq.s32.totalorder %s32, 0
      %p97 = por %p95, %p96
      %p98 = scmp.ne.s32.totalorder %s87, %s90
      %p99 = scmp.eq.s32.totalorder %s37, 7
      %p100 = por %p98, %p99
      %p101 = scmp.ne.s32.totalorder %s90, %s91
      %p102 = scmp.eq.s32.totalorder %s37, 0
      %p103 = por %p101, %p102
      %p104 = scmp.ne.s32.totalorder %s90, %s91
      %p105 = scmp.eq.s32.totalorder %s38, 7
      %p106 = por %p104, %p105
      %p108 = scmp.ne.s32.totalorder %s91, %s107
      %p109 = scmp.eq.s32.totalorder %s38, 0
      %p110 = por %p108, %p109
      %s111 = ssub.s32 %s40, %s54
      %s112 = ssub.s32 %s39, %s58
      %s113 = sor.u32 %s111, %s112
      %p114 = scmp.eq.s32.totalorder %s113, 0
      %s116 = sadd.s32 %s115, 1
      %s117 = scalar_select %p114, %s115, %s116
      %p120 = pneg %p114
      %p121 = scmp.eq.s32.totalorder %s32, 7
      %p122 = por %p120, %p121
      %p123 = scmp.ne.s32.totalorder %s115, %s118
      %p124 = scmp.eq.s32.totalorder %s32, 0
      %p125 = por %p123, %p124
      %p126 = scmp.ne.s32.totalorder %s115, %s118
      %p127 = scmp.eq.s32.totalorder %s37, 7
      %p128 = por %p126, %p127
      %p129 = scmp.ne.s32.totalorder %s118, %s119
      %p130 = scmp.eq.s32.totalorder %s37, 0
      %p131 = por %p129, %p130
      %p132 = scmp.ne.s32.totalorder %s118, %s119
      %p133 = scmp.eq.s32.totalorder %s38, 7
      %p134 = por %p132, %p133
      %p136 = scmp.ne.s32.totalorder %s119, %s135
      %p137 = scmp.eq.s32.totalorder %s38, 0
      %p138 = por %p136, %p137
      %s140 = sadd.s32 %s139, 1
      %p143 = scmp.eq.s32.totalorder %s32, 7
      %p144 = scmp.ne.s32.totalorder %s139, %s141
      %p145 = scmp.eq.s32.totalorder %s32, 0
      %p146 = por %p144, %p145
      %p147 = scmp.ne.s32.totalorder %s139, %s141
      %p148 = scmp.eq.s32.totalorder %s37, 7
      %p149 = por %p147, %p148
      %p150 = scmp.ne.s32.totalorder %s141, %s142
      %p151 = scmp.eq.s32.totalorder %s37, 0
      %p152 = por %p150, %p151
      %p153 = scmp.ne.s32.totalorder %s141, %s142
      %p154 = scmp.eq.s32.totalorder %s38, 7
      %p155 = por %p153, %p154
      %p157 = scmp.ne.s32.totalorder %s142, %s156
      %p158 = scmp.eq.s32.totalorder %s38, 0
      %p159 = por %p157, %p158
      %s160 = ssub.s32 %s40, %s54
      %s161 = ssub.s32 %s41, %s50
      %s162 = sor.u32 %s160, %s161
      %p163 = scmp.eq.s32.totalorder %s162, 0
      %s165 = sadd.s32 %s164, 1
      %s166 = scalar_select %p163, %s164, %s165
      %p169 = pneg %p163
      %p170 = scmp.eq.s32.totalorder %s32, 7
      %p171 = por %p169, %p170
      %p172 = scmp.ne.s32.totalorder %s164, %s167
      %p173 = scmp.eq.s32.totalorder %s32, 0
      %p174 = por %p172, %p173
      %p175 = scmp.ne.s32.totalorder %s164, %s167
      %p176 = scmp.eq.s32.totalorder %s37, 7
      %p177 = por %p175, %p176
      %p178 = scmp.ne.s32.totalorder %s167, %s168
      %p179 = scmp.eq.s32.totalorder %s37, 0
      %p180 = por %p178, %p179
      %p181 = scmp.ne.s32.totalorder %s167, %s168
      %p182 = scmp.eq.s32.totalorder %s38, 7
      %p183 = por %p181, %p182
      %p185 = scmp.ne.s32.totalorder %s168, %s184
      %p186 = scmp.eq.s32.totalorder %s38, 0
      %p187 = por %p185, %p186
      %s188 = ssub.s32 %s40, %s54
      %s189 = ssub.s32 %s41, %s50
      %s190 = sor.u32 %s188, %s189
      %p191 = scmp.eq.s32.totalorder %s190, 0
      %s193 = sadd.s32 %s192, 1
      %s194 = scalar_select %p191, %s192, %s193
      %p197 = pneg %p191
      %p198 = scmp.eq.s32.totalorder %s32, 7
      %p199 = por %p197, %p198
      %p200 = scmp.ne.s32.totalorder %s192, %s195
      %p201 = scmp.eq.s32.totalorder %s32, 0
      %p202 = por %p200, %p201
      %p203 = scmp.ne.s32.totalorder %s192, %s195
      %p204 = scmp.eq.s32.totalorder %s37, 7
      %p205 = por %p203, %p204
      %p206 = scmp.ne.s32.totalorder %s195, %s196
      %p207 = scmp.eq.s32.totalorder %s37, 0
      %p208 = por %p206, %p207
      %p209 = scmp.ne.s32.totalorder %s195, %s196
      %p210 = scmp.eq.s32.totalorder %s38, 7
      %p211 = por %p209, %p210
      %p213 = scmp.ne.s32.totalorder %s196, %s212
      %p214 = scmp.eq.s32.totalorder %s38, 0
      %p215 = por %p213, %p214
      %s216 = ssub.s32 %s40, %s54
      %s217 = ssub.s32 %s41, %s50
      %s218 = sor.u32 %s216, %s217
      %p219 = scmp.eq.s32.totalorder %s218, 0
      %s221 = sadd.s32 %s220, 1
      %s222 = scalar_select %p219, %s220, %s221
      %p225 = pneg %p219
      %p226 = scmp.eq.s32.totalorder %s32, 7
      %p227 = por %p225, %p226
      %p228 = scmp.ne.s32.totalorder %s220, %s223
      %p229 = scmp.eq.s32.totalorder %s32, 0
      %p230 = por %p228, %p229
      %p231 = scmp.ne.s32.totalorder %s220, %s223
      %p232 = scmp.eq.s32.totalorder %s37, 7
      %p233 = por %p231, %p232
      %p234 = scmp.ne.s32.totalorder %s223, %s224
      %p235 = scmp.eq.s32.totalorder %s37, 0
      %p236 = por %p234, %p235
      %p237 = scmp.ne.s32.totalorder %s223, %s224
      %p238 = scmp.eq.s32.totalorder %s38, 7
      %p239 = por %p237, %p238
      %p241 = scmp.ne.s32.totalorder %s224, %s240
      %p242 = scmp.eq.s32.totalorder %s38, 0
      %p243 = por %p241, %p242
      %s244 = ssub.s32 %s40, %s54
      %s245 = ssub.s32 %s41, %s50
      %s246 = sor.u32 %s244, %s245
      %p247 = scmp.eq.s32.totalorder %s246, 0
      %s249 = sadd.s32 %s248, 1
      %s250 = scalar_select %p247, %s248, %s249
      %p253 = pneg %p247
      %p254 = scmp.eq.s32.totalorder %s32, 7
      %p255 = por %p253, %p254
      %p256 = scmp.ne.s32.totalorder %s248, %s251
      %p257 = scmp.eq.s32.totalorder %s32, 0
      %p258 = por %p256, %p257
      %p259 = scmp.ne.s32.totalorder %s248, %s251
      %p260 = scmp.eq.s32.totalorder %s37, 7
      %p261 = por %p259, %p260
      %p262 = scmp.ne.s32.totalorder %s251, %s252
      %p263 = scmp.eq.s32.totalorder %s37, 0
      %p264 = por %p262, %p263
      %p265 = scmp.ne.s32.totalorder %s251, %s252
      %p266 = scmp.eq.s32.totalorder %s38, 7
      %p267 = por %p265, %p266
      %p269 = scmp.ne.s32.totalorder %s252, %s268
      %p270 = scmp.eq.s32.totalorder %s38, 0
      %p271 = por %p269, %p270
      %s273 = sadd.s32 %s272, 1
      %p276 = scmp.eq.s32.totalorder %s32, 7
      %p277 = scmp.ne.s32.totalorder %s272, %s274
      %p278 = scmp.eq.s32.totalorder %s32, 0
      %p279 = por %p277, %p278
      %p280 = scmp.ne.s32.totalorder %s272, %s274
      %p281 = scmp.eq.s32.totalorder %s37, 7
      %p282 = por %p280, %p281
      %p283 = scmp.ne.s32.totalorder %s274, %s275
      %p284 = scmp.eq.s32.totalorder %s37, 0
      %p285 = por %p283, %p284
      %p286 = scmp.ne.s32.totalorder %s274, %s275
      %p287 = scmp.eq.s32.totalorder %s38, 7
      %p288 = por %p286, %p287
      %p290 = scmp.ne.s32.totalorder %s275, %s289
      %p291 = scmp.eq.s32.totalorder %s38, 0
      %p292 = por %p290, %p291
      %s294 = sadd.s32 %s293, 1
      %p297 = scmp.eq.s32.totalorder %s32, 7
      %p298 = scmp.ne.s32.totalorder %s293, %s295
      %p299 = scmp.eq.s32.totalorder %s32, 0
      %p300 = por %p298, %p299
      %p301 = scmp.ne.s32.totalorder %s293, %s295
      %p302 = scmp.eq.s32.totalorder %s37, 7
      %p303 = por %p301, %p302
      %p304 = scmp.ne.s32.totalorder %s295, %s296
      %p305 = scmp.eq.s32.totalorder %s37, 0
      %p306 = por %p304, %p305
      %p307 = scmp.ne.s32.totalorder %s295, %s296
      %p308 = scmp.eq.s32.totalorder %s38, 7
      %p309 = por %p307, %p308
      %p311 = scmp.ne.s32.totalorder %s296, %s310
      %p312 = scmp.eq.s32.totalorder %s38, 0
      %p313 = por %p311, %p312
      %s314 = ssub.s32 %s39, %s58
      %p315 = scmp.eq.s32.totalorder %s314, 0
      %s317 = sadd.s32 %s316, 1
      %s318 = scalar_select %p315, %s316, %s317
      %p321 = pneg %p315
      %p322 = scmp.eq.s32.totalorder %s32, 7
      %p323 = por %p321, %p322
      %p324 = scmp.ne.s32.totalorder %s316, %s319
      %p325 = scmp.eq.s32.totalorder %s32, 0
      %p326 = por %p324, %p325
      %p327 = scmp.ne.s32.totalorder %s316, %s319
      %p328 = scmp.eq.s32.totalorder %s37, 7
      %p329 = por %p327, %p328
      %p330 = scmp.ne.s32.totalorder %s319, %s320
      %p331 = scmp.eq.s32.totalorder %s37, 0
      %p332 = por %p330, %p331
      %p333 = scmp.ne.s32.totalorder %s319, %s320
      %p334 = scmp.eq.s32.totalorder %s38, 7
      %p335 = por %p333, %p334
      %p337 = scmp.ne.s32.totalorder %s320, %s336
      %p338 = scmp.eq.s32.totalorder %s38, 0
      %p339 = por %p337, %p338
      %p340 = scmp.le.s32.totalorder 1, %s32
      %p341 = scmp.lt.s32.totalorder %s32, 9
      %p342 = pnand %p340, %p341
      %p343 = pneg %p342
      // Predicated region
      $region9: #{tpu_custom_call.1} parent=5 // pred_check
        _
      $region10: #{tpu_custom_call.1} parent=5 // pred_check_branch
        %345 = sbr.rel (%p342) target = $region12
      $region11: #{tpu_custom_call.1} parent=5 // pred_region
        %s346 = ssub.s32 %s32, 1
        // Predicated region
        $region13: #{tpu_custom_call.1} parent=11 // pred_check
          %p347 = pneg %p152
        $region14: #{tpu_custom_call.1} parent=11 // pred_check_branch
          %349 = sbr.rel (%p347) target = $region16
        $region15: #{tpu_custom_call.1} parent=11 // pred_region
          %s351 = ssub.s32 256, 256
          %352 = vsyncadd [#allocation10], %s351
          %s353 = sshll.u32 [#allocation11], 4
          %s354 = int_to_ptr.vmem [resolvable:$true] %s353
          %359 = dma.hbm_to_vmem [thread:$0]  %s3, 256, %s354, [#allocation10], 128, 128, 8
        $region16: #{tpu_custom_call.1} parent=11 // pred_fallthru
          _
        // Predicated region
        $region17: #{tpu_custom_call.1} parent=11 // pred_check
          %p360 = pneg %p285
        $region18: #{tpu_custom_call.1} parent=11 // pred_check_branch
          %362 = sbr.rel (%p360) target = $region20
        $region19: #{tpu_custom_call.1} parent=11 // pred_region
          %s364 = ssub.s32 512, 512
          %365 = vsyncadd [#allocation19], %s364
          %s366 = sshll.u32 [#allocation18], 4
          %s367 = int_to_ptr.vmem [resolvable:$true] %s366
          %372 = dma.hbm_to_vmem [thread:$0]  %s8, 512, %s367, [#allocation19], 128, 128, 8
        $region20: #{tpu_custom_call.1} parent=11 // pred_fallthru
          _
        // Predicated region
        $region21: #{tpu_custom_call.1} parent=11 // pred_check
          %p373 = pneg %p306
        $region22: #{tpu_custom_call.1} parent=11 // pred_check_branch
          %375 = sbr.rel (%p373) target = $region24
        $region23: #{tpu_custom_call.1} parent=11 // pred_region
          %s377 = ssub.s32 1024, 1024
          %378 = vsyncadd [#allocation19], %s377
          %s379 = sshll.u32 [#allocation20], 4
          %s380 = int_to_ptr.vmem [resolvable:$true] %s379
          %385 = dma.hbm_to_vmem [thread:$0]  %s9, 1024, %s380, [#allocation19], 256, 256, 16
        $region24: #{tpu_custom_call.1} parent=11 // pred_fallthru
          _
      $region12: #{tpu_custom_call.1} parent=5 // pred_fallthru
        _
      %p386 = scmp.lt.s32.totalorder %s32, 8
      // Predicated region
      $region25: #{tpu_custom_call.1} parent=5 // pred_check
        %p387 = pneg %p386
      $region26: #{tpu_custom_call.1} parent=5 // pred_check_branch
        %389 = sbr.rel (%p387) target = $region28
      $region27: #{tpu_custom_call.1} parent=5 // pred_region
        // Predicated region
        $region29: #{tpu_custom_call.1} parent=27 // pred_check
          %p390 = pneg %p71
        $region30: #{tpu_custom_call.1} parent=27 // pred_check_branch
          %392 = sbr.rel (%p390) target = $region32
        $region31: #{tpu_custom_call.1} parent=27 // pred_region
          %s393 = sand.u32 %s61, 1
          %s394 = scalar_lea.sflag [#allocation7], %s393
          %s395 = sand.u32 %s61, 1
          %s396 = scalar_lea.vmem [#allocation6], %s395
          %s398 = ssub.s32 16, 16
          %399 = vsyncadd %s394, %s398
          %s400 = smul.addr %s39, 16
          %s401 = scalar_lea.hbm %s0, %s400
          %s403 = sshll.u32 %s396, 4
          %s404 = int_to_ptr.vmem [resolvable:$true] %s403
          %406 = dma.hbm_to_vmem [thread:$0]  %s401, 16, %s404, %s394
        $region32: #{tpu_custom_call.1} parent=27 // pred_fallthru
          _
        // Predicated region
        $region33: #{tpu_custom_call.1} parent=27 // pred_check
          %p407 = pneg %p97
        $region34: #{tpu_custom_call.1} parent=27 // pred_check_branch
          %409 = sbr.rel (%p407) target = $region36
        $region35: #{tpu_custom_call.1} parent=27 // pred_region
          %s410 = sand.u32 %s32, 1
          %s411 = scalar_lea.sflag [#allocation10], %s410
          %s412 = sand.u32 %s87, 1
          %s413 = smul.addr %s412, 8
          %s414 = scalar_lea.vmem [#allocation9], %s413
          %s416 = ssub.s32 128, 128
          %417 = vsyncadd %s411, %s416
          %s418 = smul.addr %s39, 128
          %s419 = scalar_lea.hbm %s1, %s418
          %s421 = sshll.u32 %s414, 4
          %s422 = int_to_ptr.vmem [resolvable:$true] %s421
          %424 = dma.hbm_to_vmem [thread:$0]  %s419, 128, %s422, %s411
        $region36: #{tpu_custom_call.1} parent=27 // pred_fallthru
          _
        // Predicated region
        $region37: #{tpu_custom_call.1} parent=27 // pred_check
          %p425 = pneg %p125
        $region38: #{tpu_custom_call.1} parent=27 // pred_check_branch
          %427 = sbr.rel (%p425) target = $region40
        $region39: #{tpu_custom_call.1} parent=27 // pred_region
          %p428 = scmp.lt.s32.totalorder %s40, 1
          %s429 = scalar_select %p428, %s40, 1
          %p430 = scmp.lt.s32.totalorder %s39, 1
          %s431 = scalar_select %p430, %s39, 1
          %s432 = smul.addr %s429, 2
          %s433 = sadd.s32 %s431, %s432
          %s434 = scalar_lea.vmem %s2, %s433
        $region40: #{tpu_custom_call.1} parent=27 // pred_fallthru
          _
        // Predicated region
        $region41: #{tpu_custom_call.1} parent=27 // pred_check
          %p435 = pneg %p174
        $region42: #{tpu_custom_call.1} parent=27 // pred_check_branch
          %437 = sbr.rel (%p435) target = $region44
        $region43: #{tpu_custom_call.1} parent=27 // pred_region
          %s438 = sand.u32 %s32, 1
          %s439 = scalar_lea.sflag [#allocation13], %s438
          %s440 = sand.u32 %s164, 1
          %s441 = smul.addr %s440, 384
          %s442 = scalar_lea.vmem [#allocation12], %s441
          %s444 = ssub.s32 6144, 6144
          %445 = vsyncadd %s439, %s444
          %s446 = smul.addr %s41, 96
          %s447 = smul.addr %s40, 192
          %s448 = sadd.s32 %s446, %s447
          %s449 = smul.addr %s448, 64
          %s450 = scalar_lea.hbm %s4, %s449
          %s451 = sshll.u32 %s442, 4
          %s452 = int_to_ptr.vmem [resolvable:$true] %s451
          %457 = dma.hbm_to_vmem [thread:$0]  %s450, 6144, %s452, %s439, 384, 384, 24
        $region44: #{tpu_custom_call.1} parent=27 // pred_fallthru
          _
        // Predicated region
        $region45: #{tpu_custom_call.1} parent=27 // pred_check
          %p458 = pneg %p202
        $region46: #{tpu_custom_call.1} parent=27 // pred_check_branch
          %460 = sbr.rel (%p458) target = $region48
        $region47: #{tpu_custom_call.1} parent=27 // pred_region
          %s461 = sand.u32 %s32, 1
          %s462 = scalar_lea.sflag [#allocation13], %s461
          %s463 = sand.u32 %s192, 1
          %s464 = smul.addr %s463, 128
          %s465 = scalar_lea.vmem [#allocation14], %s464
          %s467 = ssub.s32 2048, 2048
          %468 = vsyncadd %s462, %s467
          %s469 = smul.addr %s41, 32
          %s470 = smul.addr %s40, 64
          %s471 = sadd.s32 %s469, %s470
          %s472 = smul.addr %s471, 64
          %s473 = scalar_lea.hbm %s5, %s472
          %s474 = sshll.u32 %s465, 4
          %s475 = int_to_ptr.vmem [resolvable:$true] %s474
          %480 = dma.hbm_to_vmem [thread:$0]  %s473, 2048, %s475, %s462, 64, 64, 4
        $region48: #{tpu_custom_call.1} parent=27 // pred_fallthru
          _
        // Predicated region
        $region49: #{tpu_custom_call.1} parent=27 // pred_check
          %p481 = pneg %p230
        $region50: #{tpu_custom_call.1} parent=27 // pred_check_branch
          %483 = sbr.rel (%p481) target = $region52
        $region51: #{tpu_custom_call.1} parent=27 // pred_region
          %s484 = sand.u32 %s32, 1
          %s485 = scalar_lea.sflag [#allocation16], %s484
          %s486 = sand.u32 %s220, 1
          %s487 = smul.addr %s486, 128
          %s488 = scalar_lea.vmem [#allocation15], %s487
          %s490 = ssub.s32 2048, 2048
          %491 = vsyncadd %s485, %s490
          %s492 = smul.addr %s41, 32
          %s493 = smul.addr %s40, 64
          %s494 = sadd.s32 %s492, %s493
          %s495 = smul.addr %s494, 64
          %s496 = scalar_lea.hbm %s6, %s495
          %s497 = sshll.u32 %s488, 4
          %s498 = int_to_ptr.vmem [resolvable:$true] %s497
          %503 = dma.hbm_to_vmem [thread:$0]  %s496, 2048, %s498, %s485, 128, 128, 8
        $region52: #{tpu_custom_call.1} parent=27 // pred_fallthru
          _
        // Predicated region
        $region53: #{tpu_custom_call.1} parent=27 // pred_check
          %p504 = pneg %p258
        $region54: #{tpu_custom_call.1} parent=27 // pred_check_branch
          %506 = sbr.rel (%p504) target = $region56
        $region55: #{tpu_custom_call.1} parent=27 // pred_region
          %s507 = sand.u32 %s32, 1
          %s508 = scalar_lea.sflag [#allocation16], %s507
          %s509 = sand.u32 %s248, 1
          %s510 = smul.addr %s509, 128
          %s511 = scalar_lea.vmem [#allocation17], %s510
          %s513 = ssub.s32 2048, 2048
          %514 = vsyncadd %s508, %s513
          %s515 = smul.addr %s41, 32
          %s516 = smul.addr %s40, 64
          %s517 = sadd.s32 %s515, %s516
          %s518 = smul.addr %s517, 64
          %s519 = scalar_lea.hbm %s7, %s518
          %s520 = sshll.u32 %s511, 4
          %s521 = int_to_ptr.vmem [resolvable:$true] %s520
          %526 = dma.hbm_to_vmem [thread:$0]  %s519, 2048, %s521, %s508, 64, 64, 4
        $region56: #{tpu_custom_call.1} parent=27 // pred_fallthru
          _
      $region28: #{tpu_custom_call.1} parent=5 // pred_fallthru
        _
      %p527 = scmp.le.s32.totalorder 1, %s32
      %p528 = scmp.lt.s32.totalorder %s32, 9
      %p529 = pnand %p527, %p528
      %p530 = pneg %p529
      // Predicated region
      $region57: #{tpu_custom_call.1} parent=5 // pred_check
        _
      $region58: #{tpu_custom_call.1} parent=5 // pred_check_branch
        %532 = sbr.rel (%p529) target = $region60
      $region59: #{tpu_custom_call.1} parent=5 // pred_region
        %s533 = ssub.s32 %s32, 1
        %s534 = sand.u32 %s64, 1
        %s535 = scalar_lea.sflag [#allocation7], %s534
        %s536 = sand.u32 %s64, 1
        %s537 = scalar_lea.vmem [#allocation6], %s536
        // Predicated region
        $region61: #{tpu_custom_call.1} parent=59 // pred_check
          %p538 = pneg %p77
        $region62: #{tpu_custom_call.1} parent=59 // pred_check_branch
          %540 = sbr.rel (%p538) target = $region64
        $region63: #{tpu_custom_call.1} parent=59 // pred_region
          %541 = dma.done %s535, 16
        $region64: #{tpu_custom_call.1} parent=59 // pred_fallthru
          _
        %s542 = sand.u32 %s37, 1
        %s543 = scalar_lea.sflag [#allocation10], %s542
        %s544 = sand.u32 %s90, 1
        %s545 = smul.addr %s544, 8
        %s546 = scalar_lea.vmem [#allocation9], %s545
        // Predicated region
        $region65: #{tpu_custom_call.1} parent=59 // pred_check
          %p547 = pneg %p103
        $region66: #{tpu_custom_call.1} parent=59 // pred_check_branch
          %549 = sbr.rel (%p547) target = $region68
        $region67: #{tpu_custom_call.1} parent=59 // pred_region
          %550 = dma.done %s543, 128
        $region68: #{tpu_custom_call.1} parent=59 // pred_fallthru
          _
        // Predicated region
        $region69: #{tpu_custom_call.1} parent=59 // pred_check
          %p551 = pneg %p152
        $region70: #{tpu_custom_call.1} parent=59 // pred_check_branch
          %553 = sbr.rel (%p551) target = $region72
        $region71: #{tpu_custom_call.1} parent=59 // pred_region
          %554 = dma.done [#allocation10], 256
        $region72: #{tpu_custom_call.1} parent=59 // pred_fallthru
          _
        %s555 = sand.u32 %s37, 1
        %s556 = scalar_lea.sflag [#allocation13], %s555
        %s557 = sand.u32 %s167, 1
        %s558 = smul.addr %s557, 384
        %s559 = scalar_lea.vmem [#allocation12], %s558
        // Predicated region
        $region73: #{tpu_custom_call.1} parent=59 // pred_check
          %p560 = pneg %p180
        $region74: #{tpu_custom_call.1} parent=59 // pred_check_branch
          %562 = sbr.rel (%p560) target = $region76
        $region75: #{tpu_custom_call.1} parent=59 // pred_region
          %563 = dma.done %s556, 6144
        $region76: #{tpu_custom_call.1} parent=59 // pred_fallthru
          _
        %s564 = sand.u32 %s37, 1
        %s565 = scalar_lea.sflag [#allocation13], %s564
        %s566 = sand.u32 %s195, 1
        %s567 = smul.addr %s566, 128
        %s568 = scalar_lea.vmem [#allocation14], %s567
        // Predicated region
        $region77: #{tpu_custom_call.1} parent=59 // pred_check
          %p569 = pneg %p208
        $region78: #{tpu_custom_call.1} parent=59 // pred_check_branch
          %571 = sbr.rel (%p569) target = $region80
        $region79: #{tpu_custom_call.1} parent=59 // pred_region
          %572 = dma.done %s565, 2048
        $region80: #{tpu_custom_call.1} parent=59 // pred_fallthru
          _
        %s573 = sand.u32 %s37, 1
        %s574 = scalar_lea.sflag [#allocation16], %s573
        %s575 = sand.u32 %s223, 1
        %s576 = smul.addr %s575, 128
        %s577 = scalar_lea.vmem [#allocation15], %s576
        // Predicated region
        $region81: #{tpu_custom_call.1} parent=59 // pred_check
          %p578 = pneg %p236
        $region82: #{tpu_custom_call.1} parent=59 // pred_check_branch
          %580 = sbr.rel (%p578) target = $region84
        $region83: #{tpu_custom_call.1} parent=59 // pred_region
          %581 = dma.done %s574, 2048
        $region84: #{tpu_custom_call.1} parent=59 // pred_fallthru
          _
        %s582 = sand.u32 %s37, 1
        %s583 = scalar_lea.sflag [#allocation16], %s582
        %s584 = sand.u32 %s251, 1
        %s585 = smul.addr %s584, 128
        %s586 = scalar_lea.vmem [#allocation17], %s585
        // Predicated region
        $region85: #{tpu_custom_call.1} parent=59 // pred_check
          %p587 = pneg %p264
        $region86: #{tpu_custom_call.1} parent=59 // pred_check_branch
          %589 = sbr.rel (%p587) target = $region88
        $region87: #{tpu_custom_call.1} parent=59 // pred_region
          %590 = dma.done %s583, 2048
        $region88: #{tpu_custom_call.1} parent=59 // pred_fallthru
          _
        // Predicated region
        $region89: #{tpu_custom_call.1} parent=59 // pred_check
          %p591 = pneg %p285
        $region90: #{tpu_custom_call.1} parent=59 // pred_check_branch
          %593 = sbr.rel (%p591) target = $region92
        $region91: #{tpu_custom_call.1} parent=59 // pred_region
          %594 = dma.done [#allocation19], 512
        $region92: #{tpu_custom_call.1} parent=59 // pred_fallthru
          _
        // Predicated region
        $region93: #{tpu_custom_call.1} parent=59 // pred_check
          %p595 = pneg %p306
        $region94: #{tpu_custom_call.1} parent=59 // pred_check_branch
          %597 = sbr.rel (%p595) target = $region96
        $region95: #{tpu_custom_call.1} parent=59 // pred_region
          %598 = dma.done [#allocation19], 1024
        $region96: #{tpu_custom_call.1} parent=59 // pred_fallthru
          _
        %s599 = sand.u32 %s64, 1
        %s600 = scalar_lea.sflag [#allocation7], %s599
        %s601 = sand.u32 %s64, 1
        %s602 = scalar_lea.vmem [#allocation6], %s601
        %p603 = pneg %p77
        %p604 = pneg %p74
        %s605 = sand.u32 %s37, 1
        %s606 = scalar_lea.sflag [#allocation10], %s605
        %s607 = sand.u32 %s90, 1
        %s608 = smul.addr %s607, 8
        %s609 = scalar_lea.vmem [#allocation9], %s608
        %p610 = pneg %p103
        %p611 = pneg %p100
        %p612 = scmp.lt.s32.totalorder %s43, 1
        %s613 = scalar_select %p612, %s43, 1
        %p614 = scmp.lt.s32.totalorder %s42, 1
        %s615 = scalar_select %p614, %s42, 1
        %s616 = smul.addr %s613, 2
        %s617 = sadd.s32 %s615, %s616
        %s618 = scalar_lea.vmem %s2, %s617
        %p619 = pneg %p131
        %p620 = pneg %p128
        %p621 = pneg %p152
        %p622 = pneg %p149
        %s623 = sand.u32 %s37, 1
        %s624 = scalar_lea.sflag [#allocation13], %s623
        %s625 = sand.u32 %s167, 1
        %s626 = smul.addr %s625, 384
        %s627 = scalar_lea.vmem [#allocation12], %s626
        %p628 = pneg %p180
        %p629 = pneg %p177
        %s630 = sand.u32 %s37, 1
        %s631 = scalar_lea.sflag [#allocation13], %s630
        %s632 = sand.u32 %s195, 1
        %s633 = smul.addr %s632, 128
        %s634 = scalar_lea.vmem [#allocation14], %s633
        %p635 = pneg %p208
        %p636 = pneg %p205
        %s637 = sand.u32 %s37, 1
        %s638 = scalar_lea.sflag [#allocation16], %s637
        %s639 = sand.u32 %s223, 1
        %s640 = smul.addr %s639, 128
        %s641 = scalar_lea.vmem [#allocation15], %s640
        %p642 = pneg %p236
        %p643 = pneg %p233
        %s644 = sand.u32 %s37, 1
        %s645 = scalar_lea.sflag [#allocation16], %s644
        %s646 = sand.u32 %s251, 1
        %s647 = smul.addr %s646, 128
        %s648 = scalar_lea.vmem [#allocation17], %s647
        %p649 = pneg %p264
        %p650 = pneg %p261
        %p651 = pneg %p285
        %p652 = pneg %p282
        %p653 = pneg %p306
        %p654 = pneg %p303
        %p655 = pneg %p332
        %p656 = pneg %p329
        %s657 = sand.u32 %s319, 1
        %s658 = scalar_lea.sflag [#allocation8], %s657
        %s659 = sand.u32 %s319, 1
        %s660 = smul.addr %s659, 2
        %s661 = scalar_lea.vmem [#allocation21], %s660
        %p662 = scmp.lt.s32.totalorder %s43, 1
        %s663 = scalar_select %p662, %s43, 1
        %p664 = scmp.lt.s32.totalorder %s42, 1
        %s665 = scalar_select %p664, %s42, 1
        %s666 = smul.addr %s663, 2
        %s667 = sadd.s32 %s665, %s666
        %s668 = scalar_lea.vmem %s2, %s667
        %p670 = scmp.eq.s32.totalorder %s43, 0
        %p671 = scmp.eq.s32.totalorder %s44, 0
        %p672 = pnand %p670, %p671
        %p673 = pneg %p672
        // Predicated region
        $region97: #{tpu_custom_call.1} parent=59 // pred_check
          _
        $region98: #{tpu_custom_call.1} parent=59 // pred_check_branch
          %675 = sbr.rel (%p672) target = $region100
        $region99: #{tpu_custom_call.1} parent=59 // pred_region
          %v676 = vld [vmem:[%s537] sm:$0x1]
          %677 = vst [vmem:[#allocation3] sm:$0x1] %v676
        $region100: #{tpu_custom_call.1} parent=59 // pred_fallthru
          _
        // Predicated region
        $region101: #{tpu_custom_call.1} parent=59 // pred_check
          %p678 = pneg %p671
        $region102: #{tpu_custom_call.1} parent=59 // pred_check_branch
          %680 = sbr.rel (%p678) target = $region104
        $region103: #{tpu_custom_call.1} parent=59 // pred_region
          %681 = vst [vmem:[#allocation2] sm:$0xff] 0.0
          %682 = vst [vmem:[#allocation2 + $0x8] sm:$0xff] 0.0
          %s683 = smul.u32 %s43, 8
          %s684 = scalar_lea.vmem [#allocation11], %s683
          %v685 = vld [vmem:[%s684] sm:$0xff]
          %686 = vst [vmem:[#allocation2] sm:$0x3] %v685
          %v687 = vld [vmem:[%s546] sm:$0xff]
          %688 = vst [vmem:[#allocation2 + $0x2] sm:$0xff] %v687
          %v689 = vld [vmem:[#allocation3] sm:$0x1]
          %690 = vst [vmem:[#allocation2 + $0xa] sm:$0x1] %v689
        $region104: #{tpu_custom_call.1} parent=59 // pred_fallthru
          _
        %s691 = smul.u32 %s43, 2
        %s692 = sadd.s32 %s691, %s44
        %s693 = smul.u32 %s692, 8
        %s694 = scalar_lea.vmem [#allocation18], %s693
        %v695 = vld [vmem:[%s694] sm:$0xff]
        %s696 = smul.u32 %s692, 2
        %s697 = smul.addr %s696, 8
        %s698 = scalar_lea.vmem [#allocation20], %s697
        %v699 = vld [vmem:[%s698] sm:$0xff]
        %v700 = vld [vmem:[%s698 + $0x8] sm:$0xff]
        %v701 = vld [vmem:[#allocation2] sm:$0xff]
        %v702 = vld [vmem:[#allocation2 + $0x8] sm:$0xff]
        %703 = vadd.xlane.f32.xlu0 %v701
        %v704 = vpop.xlane.xlu0 %703
        %705 = vadd.xlane.f32.xlu0 %v702
        %v706 = vpop.xlane.xlu0 %705
        %v707 = vrcp.pop 128.0
        %v708 = vmul.f32 %v704, %v707
        %v709 = vmul.f32 %v706, %v707
        %v710 = vsub.f32 %v701, %v708
        %v711 = vsub.f32 %v702, %v709
        %v712 = vmul.f32 %v710, %v710
        %v713 = vmul.f32 %v711, %v711
        %714 = vadd.xlane.f32.xlu0 %v712
        %v715 = vpop.xlane.xlu0 %714
        %716 = vadd.xlane.f32.xlu0 %v713
        %v717 = vpop.xlane.xlu0 %716
        %v718 = vmul.f32 %v715, %v707
        %v719 = vmul.f32 %v717, %v707
        %v720 = vadd.f32 %v718, 1e-05
        %v721 = vadd.f32 %v719, 1e-05
        %v722 = vrsqrt.pop %v720
        %v723 = vrsqrt.pop %v721
        %v724 = vmul.f32 %v710, %v722
        %v725 = vmul.f32 %v711, %v723
        %v726 = vlaneseq
        %v727 = vshrl.u32 %v726, 7
        %v728 = vsub.s32 0, %v727
        %v729 = vrot.slane %v695, %v728
        %v730 = vmul.f32 %v724, %v729
        %v731 = vmul.f32 %v725, %v729
        %v732 = vlaneseq
        %v733 = vshrl.u32 %v732, 7
        %v734 = vsub.s32 1, %v733
        %v735 = vrot.slane %v695, %v734
        %v736 = vadd.f32 %v730, %v735
        %v737 = vadd.f32 %v731, %v735
        %v738 = vpack.c.bf16 %v737, %v736
        %v739 = vld [vmem:[%s559] sm:$0xff]
        %v740 = vld [vmem:[%s559 + $0x8] sm:$0xff]
        %v741 = vld [vmem:[%s559 + $0x10] sm:$0xff]
        %v742 = vld [vmem:[%s559 + $0x18] sm:$0xff]
        %v743 = vld [vmem:[%s559 + $0x20] sm:$0xff]
        %v744 = vld [vmem:[%s559 + $0x28] sm:$0xff]
        %v745 = vld [vmem:[%s559 + $0x30] sm:$0xff]
        %v746 = vld [vmem:[%s559 + $0x38] sm:$0xff]
        %v747 = vld [vmem:[%s559 + $0x40] sm:$0xff]
        %v748 = vld [vmem:[%s559 + $0x48] sm:$0xff]
        %v749 = vld [vmem:[%s559 + $0x50] sm:$0xff]
        %v750 = vld [vmem:[%s559 + $0x58] sm:$0xff]
        %v751 = vld [vmem:[%s559 + $0x60] sm:$0xff]
        %v752 = vld [vmem:[%s559 + $0x68] sm:$0xff]
        %v753 = vld [vmem:[%s559 + $0x70] sm:$0xff]
        %v754 = vld [vmem:[%s559 + $0x78] sm:$0xff]
        %v755 = vld [vmem:[%s559 + $0x80] sm:$0xff]
        %v756 = vld [vmem:[%s559 + $0x88] sm:$0xff]
        %v757 = vld [vmem:[%s559 + $0x90] sm:$0xff]
        %v758 = vld [vmem:[%s559 + $0x98] sm:$0xff]
        %v759 = vld [vmem:[%s559 + $0xa0] sm:$0xff]
        %v760 = vld [vmem:[%s559 + $0xa8] sm:$0xff]
        %v761 = vld [vmem:[%s559 + $0xb0] sm:$0xff]
        %v762 = vld [vmem:[%s559 + $0xb8] sm:$0xff]
        %v763 = vld [vmem:[%s559 + $0xc0] sm:$0xff]
        %v764 = vld [vmem:[%s559 + $0xc8] sm:$0xff]
        %v765 = vld [vmem:[%s559 + $0xd0] sm:$0xff]
        %v766 = vld [vmem:[%s559 + $0xd8] sm:$0xff]
        %v767 = vld [vmem:[%s559 + $0xe0] sm:$0xff]
        %v768 = vld [vmem:[%s559 + $0xe8] sm:$0xff]
        %v769 = vld [vmem:[%s559 + $0xf0] sm:$0xff]
        %v770 = vld [vmem:[%s559 + $0xf8] sm:$0xff]
        %v771 = vld [vmem:[%s559 + $0x100] sm:$0xff]
        %v772 = vld [vmem:[%s559 + $0x108] sm:$0xff]
        %v773 = vld [vmem:[%s559 + $0x110] sm:$0xff]
        %v774 = vld [vmem:[%s559 + $0x118] sm:$0xff]
        %v775 = vld [vmem:[%s559 + $0x120] sm:$0xff]
        %v776 = vld [vmem:[%s559 + $0x128] sm:$0xff]
        %v777 = vld [vmem:[%s559 + $0x130] sm:$0xff]
        %v778 = vld [vmem:[%s559 + $0x138] sm:$0xff]
        %v779 = vld [vmem:[%s559 + $0x140] sm:$0xff]
        %v780 = vld [vmem:[%s559 + $0x148] sm:$0xff]
        %v781 = vld [vmem:[%s559 + $0x150] sm:$0xff]
        %v782 = vld [vmem:[%s559 + $0x158] sm:$0xff]
        %v783 = vld [vmem:[%s559 + $0x160] sm:$0xff]
        %v784 = vld [vmem:[%s559 + $0x168] sm:$0xff]
        %v785 = vld [vmem:[%s559 + $0x170] sm:$0xff]
        %v786 = vld [vmem:[%s559 + $0x178] sm:$0xff]
        %v835 = vunpack.c.l.b16 %v739
        %v836 = vunpack.c.h.b16 %v739
        %v837 = vunpack.c.l.b16 %v740
        %v838 = vunpack.c.h.b16 %v740
        %v839 = vunpack.c.l.b16 %v741
        %v840 = vunpack.c.h.b16 %v741
        %v841 = vunpack.c.l.b16 %v742
        %v842 = vunpack.c.h.b16 %v742
        %v843 = vunpack.c.l.b16 %v743
        %v844 = vunpack.c.h.b16 %v743
        %v845 = vunpack.c.l.b16 %v744
        %v846 = vunpack.c.h.b16 %v744
        %v847 = vunpack.c.l.b16 %v745
        %v848 = vunpack.c.h.b16 %v745
        %v849 = vunpack.c.l.b16 %v746
        %v850 = vunpack.c.h.b16 %v746
        %v851 = vunpack.c.l.b16 %v747
        %v852 = vunpack.c.h.b16 %v747
        %v853 = vunpack.c.l.b16 %v748
        %v854 = vunpack.c.h.b16 %v748
        %v855 = vunpack.c.l.b16 %v749
        %v856 = vunpack.c.h.b16 %v749
        %v857 = vunpack.c.l.b16 %v750
        %v858 = vunpack.c.h.b16 %v750
        %v859 = vunpack.c.l.b16 %v751
        %v860 = vunpack.c.h.b16 %v751
        %v861 = vunpack.c.l.b16 %v752
        %v862 = vunpack.c.h.b16 %v752
        %v863 = vunpack.c.l.b16 %v753
        %v864 = vunpack.c.h.b16 %v753
        %v865 = vunpack.c.l.b16 %v754
        %v866 = vunpack.c.h.b16 %v754
        %v867 = vunpack.c.l.b16 %v755
        %v868 = vunpack.c.h.b16 %v755
        %v869 = vunpack.c.l.b16 %v756
        %v870 = vunpack.c.h.b16 %v756
        %v871 = vunpack.c.l.b16 %v757
        %v872 = vunpack.c.h.b16 %v757
        %v873 = vunpack.c.l.b16 %v758
        %v874 = vunpack.c.h.b16 %v758
        %v875 = vunpack.c.l.b16 %v759
        %v876 = vunpack.c.h.b16 %v759
        %v877 = vunpack.c.l.b16 %v760
        %v878 = vunpack.c.h.b16 %v760
        %v879 = vunpack.c.l.b16 %v761
        %v880 = vunpack.c.h.b16 %v761
        %v881 = vunpack.c.l.b16 %v762
        %v882 = vunpack.c.h.b16 %v762
        %v883 = vunpack.c.l.b16 %v763
        %v884 = vunpack.c.h.b16 %v763
        %v885 = vunpack.c.l.b16 %v764
        %v886 = vunpack.c.h.b16 %v764
        %v887 = vunpack.c.l.b16 %v765
        %v888 = vunpack.c.h.b16 %v765
        %v889 = vunpack.c.l.b16 %v766
        %v890 = vunpack.c.h.b16 %v766
        %v891 = vunpack.c.l.b16 %v767
        %v892 = vunpack.c.h.b16 %v767
        %v893 = vunpack.c.l.b16 %v768
        %v894 = vunpack.c.h.b16 %v768
        %v895 = vunpack.c.l.b16 %v769
        %v896 = vunpack.c.h.b16 %v769
        %v897 = vunpack.c.l.b16 %v770
        %v898 = vunpack.c.h.b16 %v770
        %v899 = vunpack.c.l.b16 %v771
        %v900 = vunpack.c.h.b16 %v771
        %v901 = vunpack.c.l.b16 %v772
        %v902 = vunpack.c.h.b16 %v772
        %v903 = vunpack.c.l.b16 %v773
        %v904 = vunpack.c.h.b16 %v773
        %v905 = vunpack.c.l.b16 %v774
        %v906 = vunpack.c.h.b16 %v774
        %v907 = vunpack.c.l.b16 %v775
        %v908 = vunpack.c.h.b16 %v775
        %v909 = vunpack.c.l.b16 %v776
        %v910 = vunpack.c.h.b16 %v776
        %v911 = vunpack.c.l.b16 %v777
        %v912 = vunpack.c.h.b16 %v777
        %v913 = vunpack.c.l.b16 %v778
        %v914 = vunpack.c.h.b16 %v778
        %v915 = vunpack.c.l.b16 %v779
        %v916 = vunpack.c.h.b16 %v779
        %v917 = vunpack.c.l.b16 %v780
        %v918 = vunpack.c.h.b16 %v780
        %v919 = vunpack.c.l.b16 %v781
        %v920 = vunpack.c.h.b16 %v781
        %v921 = vunpack.c.l.b16 %v782
        %v922 = vunpack.c.h.b16 %v782
        %v923 = vunpack.c.l.b16 %v783
        %v924 = vunpack.c.h.b16 %v783
        %v925 = vunpack.c.l.b16 %v784
        %v926 = vunpack.c.h.b16 %v784
        %v927 = vunpack.c.l.b16 %v785
        %v928 = vunpack.c.h.b16 %v785
        %v929 = vunpack.c.l.b16 %v786
        %v930 = vunpack.c.h.b16 %v786
        %v931 = vpack.c.b16 %v841, %v835
        %v932 = vpack.c.b16 %v842, %v836
        %v933 = vpack.c.b16 %v843, %v837
        %v934 = vpack.c.b16 %v844, %v838
        %v935 = vpack.c.b16 %v845, %v839
        %v936 = vpack.c.b16 %v846, %v840
        %v937 = vpack.c.b16 %v853, %v847
        %v938 = vpack.c.b16 %v854, %v848
        %v939 = vpack.c.b16 %v855, %v849
        %v940 = vpack.c.b16 %v856, %v850
        %v941 = vpack.c.b16 %v857, %v851
        %v942 = vpack.c.b16 %v858, %v852
        %v943 = vpack.c.b16 %v865, %v859
        %v944 = vpack.c.b16 %v866, %v860
        %v945 = vpack.c.b16 %v867, %v861
        %v946 = vpack.c.b16 %v868, %v862
        %v947 = vpack.c.b16 %v869, %v863
        %v948 = vpack.c.b16 %v870, %v864
        %v949 = vpack.c.b16 %v877, %v871
        %v950 = vpack.c.b16 %v878, %v872
        %v951 = vpack.c.b16 %v879, %v873
        %v952 = vpack.c.b16 %v880, %v874
        %v953 = vpack.c.b16 %v881, %v875
        %v954 = vpack.c.b16 %v882, %v876
        %v955 = vpack.c.b16 %v889, %v883
        %v956 = vpack.c.b16 %v890, %v884
        %v957 = vpack.c.b16 %v891, %v885
        %v958 = vpack.c.b16 %v892, %v886
        %v959 = vpack.c.b16 %v893, %v887
        %v960 = vpack.c.b16 %v894, %v888
        %v961 = vpack.c.b16 %v901, %v895
        %v962 = vpack.c.b16 %v902, %v896
        %v963 = vpack.c.b16 %v903, %v897
        %v964 = vpack.c.b16 %v904, %v898
        %v965 = vpack.c.b16 %v905, %v899
        %v966 = vpack.c.b16 %v906, %v900
        %v967 = vpack.c.b16 %v913, %v907
        %v968 = vpack.c.b16 %v914, %v908
        %v969 = vpack.c.b16 %v915, %v909
        %v970 = vpack.c.b16 %v916, %v910
        %v971 = vpack.c.b16 %v917, %v911
        %v972 = vpack.c.b16 %v918, %v912
        %v973 = vpack.c.b16 %v925, %v919
        %v974 = vpack.c.b16 %v926, %v920
        %v975 = vpack.c.b16 %v927, %v921
        %v976 = vpack.c.b16 %v928, %v922
        %v977 = vpack.c.b16 %v929, %v923
        %v978 = vpack.c.b16 %v930, %v924
        %1027 = vmatprep.subr.bf16.mxu0 %v932
        %1028 = vmatpush1.bf16.msra.mxu0 %v931
        %1029 = vmatprep.subr.bf16.mxu0 %v938
        %1030 = vmatpush1.bf16.msra.mxu0 %v937
        %1031 = vmatprep.subr.bf16.mxu0 %v944
        %1032 = vmatpush1.bf16.msra.mxu0 %v943
        %1033 = vmatprep.subr.bf16.mxu0 %v950
        %1034 = vmatpush1.bf16.msra.mxu0 %v949
        %1035 = vmatprep.subr.bf16.mxu0 %v956
        %1036 = vmatpush1.bf16.msra.mxu0 %v955
        %1037 = vmatprep.subr.bf16.mxu0 %v962
        %1038 = vmatpush1.bf16.msra.mxu0 %v961
        %1039 = vmatprep.subr.bf16.mxu0 %v968
        %1040 = vmatpush1.bf16.msra.mxu0 %v967
        %1041 = vmatprep.subr.bf16.mxu0 %v974
        %1042 = vmatpush1.bf16.msra.mxu0 %v973
        %1043 = vmatprep.subr.bf16.mxu0 0
        %1044 = vmatpush1.bf16.msra.mxu0 0
        %1045 = vmatprep.subr.bf16.mxu0 0
        %1046 = vmatpush1.bf16.msra.mxu0 0
        %1047 = vmatprep.subr.bf16.mxu0 0
        %1048 = vmatpush1.bf16.msra.mxu0 0
        %1049 = vmatprep.subr.bf16.mxu0 0
        %1050 = vmatpush1.bf16.msra.mxu0 0
        %1051 = vmatprep.subr.bf16.mxu0 0
        %1052 = vmatpush1.bf16.msra.mxu0 0
        %1053 = vmatprep.subr.bf16.mxu0 0
        %1054 = vmatpush1.bf16.msra.mxu0 0
        %1055 = vmatprep.subr.bf16.mxu0 0
        %1056 = vmatpush1.bf16.msra.mxu0 0
        %1057 = vmatprep.subr.bf16.mxu0 0
        %1058 = vmatpush1.bf16.msra.mxu0 0
        %1059 = vmatprep.mubr.bf16.mxu0 0
        %1060 = vmatmul.mubr.bf16.gmra.mrb[0].mxu0 %v738
        %v1061 = vpop.f32.mrb[0].mxu0
        %v1062 = vadd.f32 0.0, %v1061
        %v1063 = vpop.f32.mrb[0].mxu0
        %v1064 = vadd.f32 0.0, %v1063
        %v1065 = vpop.f32.mrb[0].mxu0
        %v1066 = vadd.f32 0.0, %v1065
        %v1067 = vpop.f32.mrb[0].mxu0
        %v1068 = vadd.f32 0.0, %v1067
        %1069 = vdwg.mxu0
        %1070 = vmatprep.subr.bf16.mxu0 %v934
        %1071 = vmatpush1.bf16.msra.mxu0 %v933
        %1072 = vmatprep.subr.bf16.mxu0 %v940
        %1073 = vmatpush1.bf16.msra.mxu0 %v939
        %1074 = vmatprep.subr.bf16.mxu0 %v946
        %1075 = vmatpush1.bf16.msra.mxu0 %v945
        %1076 = vmatprep.subr.bf16.mxu0 %v952
        %1077 = vmatpush1.bf16.msra.mxu0 %v951
        %1078 = vmatprep.subr.bf16.mxu0 %v958
        %1079 = vmatpush1.bf16.msra.mxu0 %v957
        %1080 = vmatprep.subr.bf16.mxu0 %v964
        %1081 = vmatpush1.bf16.msra.mxu0 %v963
        %1082 = vmatprep.subr.bf16.mxu0 %v970
        %1083 = vmatpush1.bf16.msra.mxu0 %v969
        %1084 = vmatprep.subr.bf16.mxu0 %v976
        %1085 = vmatpush1.bf16.msra.mxu0 %v975
        %1086 = vmatprep.subr.bf16.mxu0 0
        %1087 = vmatpush1.bf16.msra.mxu0 0
        %1088 = vmatprep.subr.bf16.mxu0 0
        %1089 = vmatpush1.bf16.msra.mxu0 0
        %1090 = vmatprep.subr.bf16.mxu0 0
        %1091 = vmatpush1.bf16.msra.mxu0 0
        %1092 = vmatprep.subr.bf16.mxu0 0
        %1093 = vmatpush1.bf16.msra.mxu0 0
        %1094 = vmatprep.subr.bf16.mxu0 0
        %1095 = vmatpush1.bf16.msra.mxu0 0
        %1096 = vmatprep.subr.bf16.mxu0 0
        %1097 = vmatpush1.bf16.msra.mxu0 0
        %1098 = vmatprep.subr.bf16.mxu0 0
        %1099 = vmatpush1.bf16.msra.mxu0 0
        %1100 = vmatprep.subr.bf16.mxu0 0
        %1101 = vmatpush1.bf16.msra.mxu0 0
        %1102 = vmatprep.mubr.bf16.mxu0 0
        %1103 = vmatmul.mubr.bf16.gmra.mrb[0].mxu0 %v738
        %v1104 = vpop.f32.mrb[0].mxu0
        %v1105 = vadd.f32 0.0, %v1104
        %v1106 = vpop.f32.mrb[0].mxu0
        %v1107 = vadd.f32 0.0, %v1106
        %v1108 = vpop.f32.mrb[0].mxu0
        %v1109 = vadd.f32 0.0, %v1108
        %v1110 = vpop.f32.mrb[0].mxu0
        %v1111 = vadd.f32 0.0, %v1110
        %1112 = vdwg.mxu0
        %1113 = vmatprep.subr.bf16.mxu0 %v936
        %1114 = vmatpush1.bf16.msra.mxu0 %v935
        %1115 = vmatprep.subr.bf16.mxu0 %v942
        %1116 = vmatpush1.bf16.msra.mxu0 %v941
        %1117 = vmatprep.subr.bf16.mxu0 %v948
        %1118 = vmatpush1.bf16.msra.mxu0 %v947
        %1119 = vmatprep.subr.bf16.mxu0 %v954
        %1120 = vmatpush1.bf16.msra.mxu0 %v953
        %1121 = vmatprep.subr.bf16.mxu0 %v960
        %1122 = vmatpush1.bf16.msra.mxu0 %v959
        %1123 = vmatprep.subr.bf16.mxu0 %v966
        %1124 = vmatpush1.bf16.msra.mxu0 %v965
        %1125 = vmatprep.subr.bf16.mxu0 %v972
        %1126 = vmatpush1.bf16.msra.mxu0 %v971
        %1127 = vmatprep.subr.bf16.mxu0 %v978
        %1128 = vmatpush1.bf16.msra.mxu0 %v977
        %1129 = vmatprep.subr.bf16.mxu0 0
        %1130 = vmatpush1.bf16.msra.mxu0 0
        %1131 = vmatprep.subr.bf16.mxu0 0
        %1132 = vmatpush1.bf16.msra.mxu0 0
        %1133 = vmatprep.subr.bf16.mxu0 0
        %1134 = vmatpush1.bf16.msra.mxu0 0
        %1135 = vmatprep.subr.bf16.mxu0 0
        %1136 = vmatpush1.bf16.msra.mxu0 0
        %1137 = vmatprep.subr.bf16.mxu0 0
        %1138 = vmatpush1.bf16.msra.mxu0 0
        %1139 = vmatprep.subr.bf16.mxu0 0
        %1140 = vmatpush1.bf16.msra.mxu0 0
        %1141 = vmatprep.subr.bf16.mxu0 0
        %1142 = vmatpush1.bf16.msra.mxu0 0
        %1143 = vmatprep.subr.bf16.mxu0 0
        %1144 = vmatpush1.bf16.msra.mxu0 0
        %1145 = vmatprep.mubr.bf16.mxu0 0
        %1146 = vmatmul.mubr.bf16.gmra.mrb[0].mxu0 %v738
        %v1147 = vpop.f32.mrb[0].mxu0
        %v1148 = vadd.f32 0.0, %v1147
        %v1149 = vpop.f32.mrb[0].mxu0
        %v1150 = vadd.f32 0.0, %v1149
        %v1151 = vpop.f32.mrb[0].mxu0
        %v1152 = vadd.f32 0.0, %v1151
        %v1153 = vpop.f32.mrb[0].mxu0
        %v1154 = vadd.f32 0.0, %v1153
        %1155 = vdwg.mxu0
        %1156 = vst [vmem:[#allocation4] sm:$0xff] %v1062
        %1157 = vst [vmem:[#allocation4 + $0x8] sm:$0xff] %v1064
        %1158 = vst [vmem:[#allocation4 + $0x10] sm:$0xff] %v1105
        %1159 = vst [vmem:[#allocation4 + $0x18] sm:$0xff] %v1107
        %1160 = vst [vmem:[#allocation4 + $0x20] sm:$0xff] %v1148
        %1161 = vst [vmem:[#allocation4 + $0x28] sm:$0xff] %v1150
        %1162 = vst [vmem:[#allocation4 + $0x30] sm:$0xff] %v1066
        %1163 = vst [vmem:[#allocation4 + $0x38] sm:$0xff] %v1068
        %1164 = vst [vmem:[#allocation4 + $0x40] sm:$0xff] %v1109
        %1165 = vst [vmem:[#allocation4 + $0x48] sm:$0xff] %v1111
        %1166 = vst [vmem:[#allocation4 + $0x50] sm:$0xff] %v1152
        %1167 = vst [vmem:[#allocation4 + $0x58] sm:$0xff] %v1154
        %v1168 = vlaneseq
        %v1169 = vand.u32 %v1168, 127
        %vm1170 = vcmp.lt.s32.totalorder %v1169, 11
        %v1171 = vld [vmem:[#allocation4] sm:$0xff]
        %v1172 = vld [vmem:[#allocation4 + $0x30] sm:$0xff]
        %v1173 = vpack.c.bf16 %v1172, %v1171
        %v1174 = vld [vmem:[#allocation4 + $0x10] sm:$0xff]
        %v1175 = vld [vmem:[#allocation4 + $0x40] sm:$0xff]
        %v1176 = vpack.c.bf16 %v1175, %v1174
        %v1177 = vld [vmem:[#allocation4 + $0x20] sm:$0xff]
        %v1178 = vld [vmem:[#allocation4 + $0x50] sm:$0xff]
        %v1179 = vpack.c.bf16 %v1178, %v1177
        %1180 = vmatprep.subr.bf16.mxu0 0
        %1181 = vmatpush1.bf16.xpose.msra.mxu0 %v1176
        %1182 = vmatprep.subr.bf16.mxu0 0
        %1183 = vmatpush1.bf16.xpose.msra.mxu0 0
        %1184 = vmatprep.subr.bf16.mxu0 0
        %1185 = vmatpush1.bf16.xpose.msra.mxu0 0
        %1186 = vmatprep.subr.bf16.mxu0 0
        %1187 = vmatpush1.bf16.xpose.msra.mxu0 0
        %1188 = vmatprep.subr.bf16.mxu0 0
        %1189 = vmatpush1.bf16.xpose.msra.mxu0 0
        %1190 = vmatprep.subr.bf16.mxu0 0
        %1191 = vmatpush1.bf16.xpose.msra.mxu0 0
        %1192 = vmatprep.subr.bf16.mxu0 0
        %1193 = vmatpush1.bf16.xpose.msra.mxu0 0
        %1194 = vmatprep.subr.bf16.mxu0 0
        %1195 = vmatpush1.bf16.xpose.msra.mxu0 0
        %1196 = vmatprep.subr.bf16.mxu0 0
        %1197 = vmatpush1.bf16.xpose.msra.mxu0 0
        %1198 = vmatprep.subr.bf16.mxu0 0
        %1199 = vmatpush1.bf16.xpose.msra.mxu0 0
        %1200 = vmatprep.subr.bf16.mxu0 0
        %1201 = vmatpush1.bf16.xpose.msra.mxu0 0
        %1202 = vmatprep.subr.bf16.mxu0 0
        %1203 = vmatpush1.bf16.xpose.msra.mxu0 0
        %1204 = vmatprep.subr.bf16.mxu0 0
        %1205 = vmatpush1.bf16.xpose.msra.mxu0 0
        %1206 = vmatprep.subr.bf16.mxu0 0
        %1207 = vmatpush1.bf16.xpose.msra.mxu0 0
        %1208 = vmatprep.subr.bf16.mxu0 0
        %1209 = vmatpush1.bf16.xpose.msra.mxu0 0
        %1210 = vmatprep.subr.bf16.mxu0 0
        %1211 = vmatpush1.bf16.xpose.msra.mxu0 0
        %1212 = vmatprep.mubr.bf16.mxu0 0
        %1213 = vmatmul.mubr.bf16.gmra.mrb[0].mxu0 %v1173
        %v1214 = vpop.f32.mrb[0].mxu0
        %v1215 = vadd.f32 0.0, %v1214
        %v1216 = vpop.f32.mrb[0].mxu0
        %v1217 = vpop.f32.mrb[0].mxu0
        %v1218 = vadd.f32 0.0, %v1217
        %v1219 = vpop.f32.mrb[0].mxu0
        %1220 = vdwg.mxu0
        %v1221 = vmul.f32 %v1215, 0.088388346
        %v1222 = vmul.f32 %v1218, 0.088388346
        %v1223 = vsel %vm1170, %v1221, -1e+30
        %v1224 = vsel %vm1170, %v1222, -1e+30
        %vm1225 = vcmask 130048
        %v1226 = vsel %vm1225, %v1223, -inf
        %1227 = vmax.xlane.f32.xlu0 %v1226
        %v1228 = vpop.xlane.xlu0 %1227
        %v1229 = vsel %vm1225, %v1224, -inf
        %1230 = vmax.xlane.f32.xlu0 %v1229
        %v1231 = vpop.xlane.xlu0 %1230
        %v1232 = vsub.f32 %v1223, %v1228
        %v1233 = vsub.f32 %v1224, %v1231
        %v1234 = vmul.f32 %v1232, 1.442695
        %v1235 = vpow.pop %v1234
        %v1236 = vmul.f32 %v1233, 1.442695
        %v1237 = vpow.pop %v1236
        %v1238 = vsel %vm1225, %v1235, 0.0
        %1239 = vadd.xlane.f32.xlu0 %v1238
        %v1240 = vpop.xlane.xlu0 %1239
        %v1241 = vsel %vm1225, %v1237, 0.0
        %1242 = vadd.xlane.f32.xlu0 %v1241
        %v1243 = vpop.xlane.xlu0 %1242
        %v1244 = vrcp.pop %v1240
        %v1245 = vrcp.pop %v1243
        %v1246 = vmul.f32 %v1235, %v1244
        %v1247 = vmul.f32 %v1237, %v1245
        %v1248 = vpack.c.bf16 %v1247, %v1246
        %v1250 = vsel %vm1225, %v1248, 0
        %1252 = vmatprep.subr.bf16.mxu0 0
        %1253 = vmatpush1.bf16.msra.mxu0 %v1179
        %1254 = vmatprep.subr.bf16.mxu0 0
        %1255 = vmatpush1.bf16.msra.mxu0 0
        %1256 = vmatprep.subr.bf16.mxu0 0
        %1257 = vmatpush1.bf16.msra.mxu0 0
        %1258 = vmatprep.subr.bf16.mxu0 0
        %1259 = vmatpush1.bf16.msra.mxu0 0
        %1260 = vmatprep.subr.bf16.mxu0 0
        %1261 = vmatpush1.bf16.msra.mxu0 0
        %1262 = vmatprep.subr.bf16.mxu0 0
        %1263 = vmatpush1.bf16.msra.mxu0 0
        %1264 = vmatprep.subr.bf16.mxu0 0
        %1265 = vmatpush1.bf16.msra.mxu0 0
        %1266 = vmatprep.subr.bf16.mxu0 0
        %1267 = vmatpush1.bf16.msra.mxu0 0
        %1268 = vmatprep.subr.bf16.mxu0 0
        %1269 = vmatpush1.bf16.msra.mxu0 0
        %1270 = vmatprep.subr.bf16.mxu0 0
        %1271 = vmatpush1.bf16.msra.mxu0 0
        %1272 = vmatprep.subr.bf16.mxu0 0
        %1273 = vmatpush1.bf16.msra.mxu0 0
        %1274 = vmatprep.subr.bf16.mxu0 0
        %1275 = vmatpush1.bf16.msra.mxu0 0
        %1276 = vmatprep.subr.bf16.mxu0 0
        %1277 = vmatpush1.bf16.msra.mxu0 0
        %1278 = vmatprep.subr.bf16.mxu0 0
        %1279 = vmatpush1.bf16.msra.mxu0 0
        %1280 = vmatprep.subr.bf16.mxu0 0
        %1281 = vmatpush1.bf16.msra.mxu0 0
        %1282 = vmatprep.subr.bf16.mxu0 0
        %1283 = vmatpush1.bf16.msra.mxu0 0
        %1284 = vmatprep.mubr.bf16.mxu0 0
        %1285 = vmatmul.mubr.bf16.gmra.mrb[0].mxu0 %v1250
        %v1286 = vpop.f32.mrb[0].mxu0
        %v1287 = vadd.f32 0.0, %v1286
        %v1288 = vpop.f32.mrb[0].mxu0
        %v1289 = vpop.f32.mrb[0].mxu0
        %v1290 = vadd.f32 0.0, %v1289
        %v1291 = vpop.f32.mrb[0].mxu0
        %1292 = vdwg.mxu0
        %1293 = vst [vmem:[#allocation5] sm:$0xff] %v1287
        %1294 = vst [vmem:[#allocation5 + $0x10] sm:$0xff] %v1290
        %v1295 = vld [vmem:[#allocation4 + $0x8] sm:$0xff]
        %v1296 = vld [vmem:[#allocation4 + $0x38] sm:$0xff]
        %v1297 = vpack.c.bf16 %v1296, %v1295
        %v1298 = vld [vmem:[#allocation4 + $0x18] sm:$0xff]
        %v1299 = vld [vmem:[#allocation4 + $0x48] sm:$0xff]
        %v1300 = vpack.c.bf16 %v1299, %v1298
        %v1301 = vld [vmem:[#allocation4 + $0x28] sm:$0xff]
        %v1302 = vld [vmem:[#allocation4 + $0x58] sm:$0xff]
        %v1303 = vpack.c.bf16 %v1302, %v1301
        %1304 = vmatprep.subr.bf16.mxu0 0
        %1305 = vmatpush1.bf16.xpose.msra.mxu0 %v1300
        %1306 = vmatprep.subr.bf16.mxu0 0
        %1307 = vmatpush1.bf16.xpose.msra.mxu0 0
        %1308 = vmatprep.subr.bf16.mxu0 0
        %1309 = vmatpush1.bf16.xpose.msra.mxu0 0
        %1310 = vmatprep.subr.bf16.mxu0 0
        %1311 = vmatpush1.bf16.xpose.msra.mxu0 0
        %1312 = vmatprep.subr.bf16.mxu0 0
        %1313 = vmatpush1.bf16.xpose.msra.mxu0 0
        %1314 = vmatprep.subr.bf16.mxu0 0
        %1315 = vmatpush1.bf16.xpose.msra.mxu0 0
        %1316 = vmatprep.subr.bf16.mxu0 0
        %1317 = vmatpush1.bf16.xpose.msra.mxu0 0
        %1318 = vmatprep.subr.bf16.mxu0 0
        %1319 = vmatpush1.bf16.xpose.msra.mxu0 0
        %1320 = vmatprep.subr.bf16.mxu0 0
        %1321 = vmatpush1.bf16.xpose.msra.mxu0 0
        %1322 = vmatprep.subr.bf16.mxu0 0
        %1323 = vmatpush1.bf16.xpose.msra.mxu0 0
        %1324 = vmatprep.subr.bf16.mxu0 0
        %1325 = vmatpush1.bf16.xpose.msra.mxu0 0
        %1326 = vmatprep.subr.bf16.mxu0 0
        %1327 = vmatpush1.bf16.xpose.msra.mxu0 0
        %1328 = vmatprep.subr.bf16.mxu0 0
        %1329 = vmatpush1.bf16.xpose.msra.mxu0 0
        %1330 = vmatprep.subr.bf16.mxu0 0
        %1331 = vmatpush1.bf16.xpose.msra.mxu0 0
        %1332 = vmatprep.subr.bf16.mxu0 0
        %1333 = vmatpush1.bf16.xpose.msra.mxu0 0
        %1334 = vmatprep.subr.bf16.mxu0 0
        %1335 = vmatpush1.bf16.xpose.msra.mxu0 0
        %1336 = vmatprep.mubr.bf16.mxu0 0
        %1337 = vmatmul.mubr.bf16.gmra.mrb[0].mxu0 %v1297
        %v1338 = vpop.f32.mrb[0].mxu0
        %v1339 = vadd.f32 0.0, %v1338
        %v1340 = vpop.f32.mrb[0].mxu0
        %v1341 = vpop.f32.mrb[0].mxu0
        %v1342 = vadd.f32 0.0, %v1341
        %v1343 = vpop.f32.mrb[0].mxu0
        %1344 = vdwg.mxu0
        %v1345 = vmul.f32 %v1339, 0.088388346
        %v1346 = vmul.f32 %v1342, 0.088388346
        %v1347 = vsel %vm1170, %v1345, -1e+30
        %v1348 = vsel %vm1170, %v1346, -1e+30
        %v1349 = vsel %vm1225, %v1347, -inf
        %1350 = vmax.xlane.f32.xlu0 %v1349
        %v1351 = vpop.xlane.xlu0 %1350
        %v1352 = vsel %vm1225, %v1348, -inf
        %1353 = vmax.xlane.f32.xlu0 %v1352
        %v1354 = vpop.xlane.xlu0 %1353
        %v1355 = vsub.f32 %v1347, %v1351
        %v1356 = vsub.f32 %v1348, %v1354
        %v1357 = vmul.f32 %v1355, 1.442695
        %v1358 = vpow.pop %v1357
        %v1359 = vmul.f32 %v1356, 1.442695
        %v1360 = vpow.pop %v1359
        %v1361 = vsel %vm1225, %v1358, 0.0
        %1362 = vadd.xlane.f32.xlu0 %v1361
        %v1363 = vpop.xlane.xlu0 %1362
        %v1364 = vsel %vm1225, %v1360, 0.0
        %1365 = vadd.xlane.f32.xlu0 %v1364
        %v1366 = vpop.xlane.xlu0 %1365
        %v1367 = vrcp.pop %v1363
        %v1368 = vrcp.pop %v1366
        %v1369 = vmul.f32 %v1358, %v1367
        %v1370 = vmul.f32 %v1360, %v1368
        %v1371 = vpack.c.bf16 %v1370, %v1369
        %v1373 = vsel %vm1225, %v1371, 0
        %1375 = vmatprep.subr.bf16.mxu0 0
        %1376 = vmatpush1.bf16.msra.mxu0 %v1303
        %1377 = vmatprep.subr.bf16.mxu0 0
        %1378 = vmatpush1.bf16.msra.mxu0 0
        %1379 = vmatprep.subr.bf16.mxu0 0
        %1380 = vmatpush1.bf16.msra.mxu0 0
        %1381 = vmatprep.subr.bf16.mxu0 0
        %1382 = vmatpush1.bf16.msra.mxu0 0
        %1383 = vmatprep.subr.bf16.mxu0 0
        %1384 = vmatpush1.bf16.msra.mxu0 0
        %1385 = vmatprep.subr.bf16.mxu0 0
        %1386 = vmatpush1.bf16.msra.mxu0 0
        %1387 = vmatprep.subr.bf16.mxu0 0
        %1388 = vmatpush1.bf16.msra.mxu0 0
        %1389 = vmatprep.subr.bf16.mxu0 0
        %1390 = vmatpush1.bf16.msra.mxu0 0
        %1391 = vmatprep.subr.bf16.mxu0 0
        %1392 = vmatpush1.bf16.msra.mxu0 0
        %1393 = vmatprep.subr.bf16.mxu0 0
        %1394 = vmatpush1.bf16.msra.mxu0 0
        %1395 = vmatprep.subr.bf16.mxu0 0
        %1396 = vmatpush1.bf16.msra.mxu0 0
        %1397 = vmatprep.subr.bf16.mxu0 0
        %1398 = vmatpush1.bf16.msra.mxu0 0
        %1399 = vmatprep.subr.bf16.mxu0 0
        %1400 = vmatpush1.bf16.msra.mxu0 0
        %1401 = vmatprep.subr.bf16.mxu0 0
        %1402 = vmatpush1.bf16.msra.mxu0 0
        %1403 = vmatprep.subr.bf16.mxu0 0
        %1404 = vmatpush1.bf16.msra.mxu0 0
        %1405 = vmatprep.subr.bf16.mxu0 0
        %1406 = vmatpush1.bf16.msra.mxu0 0
        %1407 = vmatprep.mubr.bf16.mxu0 0
        %1408 = vmatmul.mubr.bf16.gmra.mrb[0].mxu0 %v1373
        %v1409 = vpop.f32.mrb[0].mxu0
        %v1410 = vadd.f32 0.0, %v1409
        %v1411 = vpop.f32.mrb[0].mxu0
        %v1412 = vpop.f32.mrb[0].mxu0
        %v1413 = vadd.f32 0.0, %v1412
        %v1414 = vpop.f32.mrb[0].mxu0
        %1415 = vdwg.mxu0
        %1416 = vst [vmem:[#allocation5 + $0x8] sm:$0xff] %v1410
        %1417 = vst [vmem:[#allocation5 + $0x18] sm:$0xff] %v1413
        %v1418 = vld [vmem:[#allocation5] sm:$0xff]
        %v1419 = vld [vmem:[#allocation5 + $0x8] sm:$0xff]
        %v1420 = vld [vmem:[#allocation5 + $0x10] sm:$0xff]
        %v1421 = vld [vmem:[#allocation5 + $0x18] sm:$0xff]
        %v1422 = vpack.c.bf16 %v1420, %v1418
        %v1423 = vpack.c.bf16 %v1421, %v1419
        %v1424 = vld [vmem:[%s568] sm:$0xf]
        %v1425 = vld [vmem:[%s568 + $0x4] sm:$0xf]
        %v1426 = vld [vmem:[%s568 + $0x8] sm:$0xf]
        %v1427 = vld [vmem:[%s568 + $0xc] sm:$0xf]
        %v1428 = vld [vmem:[%s568 + $0x10] sm:$0xf]
        %v1429 = vld [vmem:[%s568 + $0x14] sm:$0xf]
        %v1430 = vld [vmem:[%s568 + $0x18] sm:$0xf]
        %v1431 = vld [vmem:[%s568 + $0x1c] sm:$0xf]
        %v1432 = vld [vmem:[%s568 + $0x20] sm:$0xf]
        %v1433 = vld [vmem:[%s568 + $0x24] sm:$0xf]
        %v1434 = vld [vmem:[%s568 + $0x28] sm:$0xf]
        %v1435 = vld [vmem:[%s568 + $0x2c] sm:$0xf]
        %v1436 = vld [vmem:[%s568 + $0x30] sm:$0xf]
        %v1437 = vld [vmem:[%s568 + $0x34] sm:$0xf]
        %v1438 = vld [vmem:[%s568 + $0x38] sm:$0xf]
        %v1439 = vld [vmem:[%s568 + $0x3c] sm:$0xf]
        %v1440 = vld [vmem:[%s568 + $0x40] sm:$0xf]
        %v1441 = vld [vmem:[%s568 + $0x44] sm:$0xf]
        %v1442 = vld [vmem:[%s568 + $0x48] sm:$0xf]
        %v1443 = vld [vmem:[%s568 + $0x4c] sm:$0xf]
        %v1444 = vld [vmem:[%s568 + $0x50] sm:$0xf]
        %v1445 = vld [vmem:[%s568 + $0x54] sm:$0xf]
        %v1446 = vld [vmem:[%s568 + $0x58] sm:$0xf]
        %v1447 = vld [vmem:[%s568 + $0x5c] sm:$0xf]
        %v1448 = vld [vmem:[%s568 + $0x60] sm:$0xf]
        %v1449 = vld [vmem:[%s568 + $0x64] sm:$0xf]
        %v1450 = vld [vmem:[%s568 + $0x68] sm:$0xf]
        %v1451 = vld [vmem:[%s568 + $0x6c] sm:$0xf]
        %v1452 = vld [vmem:[%s568 + $0x70] sm:$0xf]
        %v1453 = vld [vmem:[%s568 + $0x74] sm:$0xf]
        %v1454 = vld [vmem:[%s568 + $0x78] sm:$0xf]
        %v1455 = vld [vmem:[%s568 + $0x7c] sm:$0xf]
        %v1456 = vlaneseq
        %v1457 = vshrl.u32 %v1456, 7
        %v1458 = vsub.s32 2, %v1457
        %v1459 = vrot.slane %v695, %v1458
        %v1492 = vunpack.c.l.b16 %v1424
        %v1493 = vunpack.c.l.b16 %v1425
        %v1494 = vunpack.c.l.b16 %v1426
        %v1495 = vunpack.c.l.b16 %v1427
        %v1496 = vunpack.c.l.b16 %v1428
        %v1497 = vunpack.c.l.b16 %v1429
        %v1498 = vunpack.c.l.b16 %v1430
        %v1499 = vunpack.c.l.b16 %v1431
        %v1500 = vunpack.c.l.b16 %v1432
        %v1501 = vunpack.c.l.b16 %v1433
        %v1502 = vunpack.c.l.b16 %v1434
        %v1503 = vunpack.c.l.b16 %v1435
        %v1504 = vunpack.c.l.b16 %v1436
        %v1505 = vunpack.c.l.b16 %v1437
        %v1506 = vunpack.c.l.b16 %v1438
        %v1507 = vunpack.c.l.b16 %v1439
        %v1508 = vunpack.c.l.b16 %v1440
        %v1509 = vunpack.c.l.b16 %v1441
        %v1510 = vunpack.c.l.b16 %v1442
        %v1511 = vunpack.c.l.b16 %v1443
        %v1512 = vunpack.c.l.b16 %v1444
        %v1513 = vunpack.c.l.b16 %v1445
        %v1514 = vunpack.c.l.b16 %v1446
        %v1515 = vunpack.c.l.b16 %v1447
        %v1516 = vunpack.c.l.b16 %v1448
        %v1517 = vunpack.c.l.b16 %v1449
        %v1518 = vunpack.c.l.b16 %v1450
        %v1519 = vunpack.c.l.b16 %v1451
        %v1520 = vunpack.c.l.b16 %v1452
        %v1521 = vunpack.c.l.b16 %v1453
        %v1522 = vunpack.c.l.b16 %v1454
        %v1523 = vunpack.c.l.b16 %v1455
        %v1524 = vpack.c.b16 %v1493, %v1492
        %v1525 = vpack.c.b16 %v1495, %v1494
        %v1526 = vpack.c.b16 %v1497, %v1496
        %v1527 = vpack.c.b16 %v1499, %v1498
        %v1528 = vpack.c.b16 %v1501, %v1500
        %v1529 = vpack.c.b16 %v1503, %v1502
        %v1530 = vpack.c.b16 %v1505, %v1504
        %v1531 = vpack.c.b16 %v1507, %v1506
        %v1532 = vpack.c.b16 %v1509, %v1508
        %v1533 = vpack.c.b16 %v1511, %v1510
        %v1534 = vpack.c.b16 %v1513, %v1512
        %v1535 = vpack.c.b16 %v1515, %v1514
        %v1536 = vpack.c.b16 %v1517, %v1516
        %v1537 = vpack.c.b16 %v1519, %v1518
        %v1538 = vpack.c.b16 %v1521, %v1520
        %v1539 = vpack.c.b16 %v1523, %v1522
        %1556 = vmatprep.subr.bf16.mxu0 0
        %1557 = vmatpush1.bf16.msra.mxu0 %v1524
        %1558 = vmatprep.subr.bf16.mxu0 0
        %1559 = vmatpush1.bf16.msra.mxu0 %v1525
        %1560 = vmatprep.subr.bf16.mxu0 0
        %1561 = vmatpush1.bf16.msra.mxu0 %v1526
        %1562 = vmatprep.subr.bf16.mxu0 0
        %1563 = vmatpush1.bf16.msra.mxu0 %v1527
        %1564 = vmatprep.subr.bf16.mxu0 0
        %1565 = vmatpush1.bf16.msra.mxu0 %v1528
        %1566 = vmatprep.subr.bf16.mxu0 0
        %1567 = vmatpush1.bf16.msra.mxu0 %v1529
        %1568 = vmatprep.subr.bf16.mxu0 0
        %1569 = vmatpush1.bf16.msra.mxu0 %v1530
        %1570 = vmatprep.subr.bf16.mxu0 0
        %1571 = vmatpush1.bf16.msra.mxu0 %v1531
        %1572 = vmatprep.subr.bf16.mxu0 0
        %1573 = vmatpush1.bf16.msra.mxu0 %v1532
        %1574 = vmatprep.subr.bf16.mxu0 0
        %1575 = vmatpush1.bf16.msra.mxu0 %v1533
        %1576 = vmatprep.subr.bf16.mxu0 0
        %1577 = vmatpush1.bf16.msra.mxu0 %v1534
        %1578 = vmatprep.subr.bf16.mxu0 0
        %1579 = vmatpush1.bf16.msra.mxu0 %v1535
        %1580 = vmatprep.subr.bf16.mxu0 0
        %1581 = vmatpush1.bf16.msra.mxu0 %v1536
        %1582 = vmatprep.subr.bf16.mxu0 0
        %1583 = vmatpush1.bf16.msra.mxu0 %v1537
        %1584 = vmatprep.subr.bf16.mxu0 0
        %1585 = vmatpush1.bf16.msra.mxu0 %v1538
        %1586 = vmatprep.subr.bf16.mxu0 0
        %1587 = vmatpush1.bf16.msra.mxu0 %v1539
        %1588 = vmatprep.mubr.bf16.mxu0 %v1423
        %1589 = vmatmul.mubr.bf16.gmra.mrb[0].mxu0 %v1422
        %v1590 = vpop.f32.mrb[0].mxu0
        %v1591 = vadd.f32 %v1459, %v1590
        %v1592 = vpop.f32.mrb[0].mxu0
        %v1593 = vpop.f32.mrb[0].mxu0
        %v1594 = vadd.f32 %v1459, %v1593
        %v1595 = vpop.f32.mrb[0].mxu0
        %1596 = vdwg.mxu0
        %v1597 = vadd.f32 %v701, %v1591
        %v1598 = vadd.f32 %v702, %v1594
        %1599 = vst [vmem:[#allocation2] sm:$0xff] %v1597
        %1600 = vst [vmem:[#allocation2 + $0x8] sm:$0xff] %v1598
        %v1601 = vld [vmem:[#allocation2] sm:$0xff]
        %v1602 = vld [vmem:[#allocation2 + $0x8] sm:$0xff]
        %1603 = vadd.xlane.f32.xlu0 %v1601
        %v1604 = vpop.xlane.xlu0 %1603
        %1605 = vadd.xlane.f32.xlu0 %v1602
        %v1606 = vpop.xlane.xlu0 %1605
        %v1607 = vmul.f32 %v1604, %v707
        %v1608 = vmul.f32 %v1606, %v707
        %v1609 = vsub.f32 %v1601, %v1607
        %v1610 = vsub.f32 %v1602, %v1608
        %v1611 = vmul.f32 %v1609, %v1609
        %v1612 = vmul.f32 %v1610, %v1610
        %1613 = vadd.xlane.f32.xlu0 %v1611
        %v1614 = vpop.xlane.xlu0 %1613
        %1615 = vadd.xlane.f32.xlu0 %v1612
        %v1616 = vpop.xlane.xlu0 %1615
        %v1617 = vmul.f32 %v1614, %v707
        %v1618 = vmul.f32 %v1616, %v707
        %v1619 = vadd.f32 %v1617, 1e-05
        %v1620 = vadd.f32 %v1618, 1e-05
        %v1621 = vrsqrt.pop %v1619
        %v1622 = vrsqrt.pop %v1620
        %v1623 = vmul.f32 %v1609, %v1621
        %v1624 = vmul.f32 %v1610, %v1622
        %v1625 = vlaneseq
        %v1626 = vshrl.u32 %v1625, 7
        %v1627 = vsub.s32 3, %v1626
        %v1628 = vrot.slane %v695, %v1627
        %v1629 = vmul.f32 %v1623, %v1628
        %v1630 = vmul.f32 %v1624, %v1628
        %v1631 = vlaneseq
        %v1632 = vshrl.u32 %v1631, 7
        %v1633 = vsub.s32 4, %v1632
        %v1634 = vrot.slane %v695, %v1633
        %v1635 = vadd.f32 %v1629, %v1634
        %v1636 = vadd.f32 %v1630, %v1634
        %v1637 = vpack.c.bf16 %v1636, %v1635
        %v1638 = vld [vmem:[%s577] sm:$0xff]
        %v1639 = vld [vmem:[%s577 + $0x8] sm:$0xff]
        %v1640 = vld [vmem:[%s577 + $0x10] sm:$0xff]
        %v1641 = vld [vmem:[%s577 + $0x18] sm:$0xff]
        %v1642 = vld [vmem:[%s577 + $0x20] sm:$0xff]
        %v1643 = vld [vmem:[%s577 + $0x28] sm:$0xff]
        %v1644 = vld [vmem:[%s577 + $0x30] sm:$0xff]
        %v1645 = vld [vmem:[%s577 + $0x38] sm:$0xff]
        %v1646 = vld [vmem:[%s577 + $0x40] sm:$0xff]
        %v1647 = vld [vmem:[%s577 + $0x48] sm:$0xff]
        %v1648 = vld [vmem:[%s577 + $0x50] sm:$0xff]
        %v1649 = vld [vmem:[%s577 + $0x58] sm:$0xff]
        %v1650 = vld [vmem:[%s577 + $0x60] sm:$0xff]
        %v1651 = vld [vmem:[%s577 + $0x68] sm:$0xff]
        %v1652 = vld [vmem:[%s577 + $0x70] sm:$0xff]
        %v1653 = vld [vmem:[%s577 + $0x78] sm:$0xff]
        %v1654 = vlaneseq
        %v1655 = vshrl.u32 %v1654, 7
        %v1656 = vsub.s32 0, %v1655
        %v1657 = vrot.slane %v699, %v1656
        %v1658 = vlaneseq
        %v1659 = vshrl.u32 %v1658, 7
        %v1660 = vsub.s32 0, %v1659
        %v1661 = vrot.slane %v700, %v1660
        %v1678 = vunpack.c.l.b16 %v1638
        %v1679 = vunpack.c.h.b16 %v1638
        %v1680 = vunpack.c.l.b16 %v1639
        %v1681 = vunpack.c.h.b16 %v1639
        %v1682 = vunpack.c.l.b16 %v1640
        %v1683 = vunpack.c.h.b16 %v1640
        %v1684 = vunpack.c.l.b16 %v1641
        %v1685 = vunpack.c.h.b16 %v1641
        %v1686 = vunpack.c.l.b16 %v1642
        %v1687 = vunpack.c.h.b16 %v1642
        %v1688 = vunpack.c.l.b16 %v1643
        %v1689 = vunpack.c.h.b16 %v1643
        %v1690 = vunpack.c.l.b16 %v1644
        %v1691 = vunpack.c.h.b16 %v1644
        %v1692 = vunpack.c.l.b16 %v1645
        %v1693 = vunpack.c.h.b16 %v1645
        %v1694 = vunpack.c.l.b16 %v1646
        %v1695 = vunpack.c.h.b16 %v1646
        %v1696 = vunpack.c.l.b16 %v1647
        %v1697 = vunpack.c.h.b16 %v1647
        %v1698 = vunpack.c.l.b16 %v1648
        %v1699 = vunpack.c.h.b16 %v1648
        %v1700 = vunpack.c.l.b16 %v1649
        %v1701 = vunpack.c.h.b16 %v1649
        %v1702 = vunpack.c.l.b16 %v1650
        %v1703 = vunpack.c.h.b16 %v1650
        %v1704 = vunpack.c.l.b16 %v1651
        %v1705 = vunpack.c.h.b16 %v1651
        %v1706 = vunpack.c.l.b16 %v1652
        %v1707 = vunpack.c.h.b16 %v1652
        %v1708 = vunpack.c.l.b16 %v1653
        %v1709 = vunpack.c.h.b16 %v1653
        %v1710 = vpack.c.b16 %v1680, %v1678
        %v1711 = vpack.c.b16 %v1681, %v1679
        %v1712 = vpack.c.b16 %v1684, %v1682
        %v1713 = vpack.c.b16 %v1685, %v1683
        %v1714 = vpack.c.b16 %v1688, %v1686
        %v1715 = vpack.c.b16 %v1689, %v1687
        %v1716 = vpack.c.b16 %v1692, %v1690
        %v1717 = vpack.c.b16 %v1693, %v1691
        %v1718 = vpack.c.b16 %v1696, %v1694
        %v1719 = vpack.c.b16 %v1697, %v1695
        %v1720 = vpack.c.b16 %v1700, %v1698
        %v1721 = vpack.c.b16 %v1701, %v1699
        %v1722 = vpack.c.b16 %v1704, %v1702
        %v1723 = vpack.c.b16 %v1705, %v1703
        %v1724 = vpack.c.b16 %v1708, %v1706
        %v1725 = vpack.c.b16 %v1709, %v1707
        %1742 = vmatprep.subr.bf16.mxu0 %v1711
        %1743 = vmatpush1.bf16.msra.mxu0 %v1710
        %1744 = vmatprep.subr.bf16.mxu0 %v1713
        %1745 = vmatpush1.bf16.msra.mxu0 %v1712
        %1746 = vmatprep.subr.bf16.mxu0 %v1715
        %1747 = vmatpush1.bf16.msra.mxu0 %v1714
        %1748 = vmatprep.subr.bf16.mxu0 %v1717
        %1749 = vmatpush1.bf16.msra.mxu0 %v1716
        %1750 = vmatprep.subr.bf16.mxu0 %v1719
        %1751 = vmatpush1.bf16.msra.mxu0 %v1718
        %1752 = vmatprep.subr.bf16.mxu0 %v1721
        %1753 = vmatpush1.bf16.msra.mxu0 %v1720
        %1754 = vmatprep.subr.bf16.mxu0 %v1723
        %1755 = vmatpush1.bf16.msra.mxu0 %v1722
        %1756 = vmatprep.subr.bf16.mxu0 %v1725
        %1757 = vmatpush1.bf16.msra.mxu0 %v1724
        %1758 = vmatprep.subr.bf16.mxu0 0
        %1759 = vmatpush1.bf16.msra.mxu0 0
        %1760 = vmatprep.subr.bf16.mxu0 0
        %1761 = vmatpush1.bf16.msra.mxu0 0
        %1762 = vmatprep.subr.bf16.mxu0 0
        %1763 = vmatpush1.bf16.msra.mxu0 0
        %1764 = vmatprep.subr.bf16.mxu0 0
        %1765 = vmatpush1.bf16.msra.mxu0 0
        %1766 = vmatprep.subr.bf16.mxu0 0
        %1767 = vmatpush1.bf16.msra.mxu0 0
        %1768 = vmatprep.subr.bf16.mxu0 0
        %1769 = vmatpush1.bf16.msra.mxu0 0
        %1770 = vmatprep.subr.bf16.mxu0 0
        %1771 = vmatpush1.bf16.msra.mxu0 0
        %1772 = vmatprep.subr.bf16.mxu0 0
        %1773 = vmatpush1.bf16.msra.mxu0 0
        %1774 = vmatprep.mubr.bf16.mxu0 0
        %1775 = vmatmul.mubr.bf16.gmra.mrb[0].mxu0 %v1637
        %v1776 = vpop.f32.mrb[0].mxu0
        %v1777 = vadd.f32 %v1657, %v1776
        %v1778 = vpop.f32.mrb[0].mxu0
        %v1779 = vadd.f32 %v1661, %v1778
        %v1780 = vpop.f32.mrb[0].mxu0
        %v1781 = vadd.f32 %v1657, %v1780
        %v1782 = vpop.f32.mrb[0].mxu0
        %v1783 = vadd.f32 %v1661, %v1782
        %1784 = vdwg.mxu0
        %v1785 = vmul.f32 %v1777, %v1777
        %v1786 = vmul.f32 %v1779, %v1779
        %v1787 = vmul.f32 %v1781, %v1781
        %v1788 = vmul.f32 %v1783, %v1783
        %v1789 = vmul.f32 %v1777, %v1785
        %v1790 = vmul.f32 %v1779, %v1786
        %v1791 = vmul.f32 %v1781, %v1787
        %v1792 = vmul.f32 %v1783, %v1788
        %v1793 = vmul.f32 %v1789, 0.044715
        %v1794 = vmul.f32 %v1790, 0.044715
        %v1795 = vmul.f32 %v1791, 0.044715
        %v1796 = vmul.f32 %v1792, 0.044715
        %v1797 = vadd.f32 %v1777, %v1793
        %v1798 = vadd.f32 %v1779, %v1794
        %v1799 = vadd.f32 %v1781, %v1795
        %v1800 = vadd.f32 %v1783, %v1796
        %v1801 = vmul.f32 %v1797, 0.7978846
        %v1802 = vmul.f32 %v1798, 0.7978846
        %v1803 = vmul.f32 %v1799, 0.7978846
        %v1804 = vmul.f32 %v1800, 0.7978846
        %v1805 = vtanh.pop %v1801
        %v1806 = vtanh.pop %v1802
        %v1807 = vtanh.pop %v1803
        %v1808 = vtanh.pop %v1804
        %v1809 = vadd.f32 %v1805, 1.0
        %v1810 = vadd.f32 %v1806, 1.0
        %v1811 = vadd.f32 %v1807, 1.0
        %v1812 = vadd.f32 %v1808, 1.0
        %v1813 = vmul.f32 %v1809, 0.5
        %v1814 = vmul.f32 %v1810, 0.5
        %v1815 = vmul.f32 %v1811, 0.5
        %v1816 = vmul.f32 %v1812, 0.5
        %v1817 = vmul.f32 %v1777, %v1813
        %v1818 = vmul.f32 %v1779, %v1814
        %v1819 = vmul.f32 %v1781, %v1815
        %v1820 = vmul.f32 %v1783, %v1816
        %v1821 = vpack.c.bf16 %v1819, %v1817
        %v1822 = vpack.c.bf16 %v1820, %v1818
        %v1823 = vld [vmem:[%s586] sm:$0xf]
        %v1824 = vld [vmem:[%s586 + $0x4] sm:$0xf]
        %v1825 = vld [vmem:[%s586 + $0x8] sm:$0xf]
        %v1826 = vld [vmem:[%s586 + $0xc] sm:$0xf]
        %v1827 = vld [vmem:[%s586 + $0x10] sm:$0xf]
        %v1828 = vld [vmem:[%s586 + $0x14] sm:$0xf]
        %v1829 = vld [vmem:[%s586 + $0x18] sm:$0xf]
        %v1830 = vld [vmem:[%s586 + $0x1c] sm:$0xf]
        %v1831 = vld [vmem:[%s586 + $0x20] sm:$0xf]
        %v1832 = vld [vmem:[%s586 + $0x24] sm:$0xf]
        %v1833 = vld [vmem:[%s586 + $0x28] sm:$0xf]
        %v1834 = vld [vmem:[%s586 + $0x2c] sm:$0xf]
        %v1835 = vld [vmem:[%s586 + $0x30] sm:$0xf]
        %v1836 = vld [vmem:[%s586 + $0x34] sm:$0xf]
        %v1837 = vld [vmem:[%s586 + $0x38] sm:$0xf]
        %v1838 = vld [vmem:[%s586 + $0x3c] sm:$0xf]
        %v1839 = vld [vmem:[%s586 + $0x40] sm:$0xf]
        %v1840 = vld [vmem:[%s586 + $0x44] sm:$0xf]
        %v1841 = vld [vmem:[%s586 + $0x48] sm:$0xf]
        %v1842 = vld [vmem:[%s586 + $0x4c] sm:$0xf]
        %v1843 = vld [vmem:[%s586 + $0x50] sm:$0xf]
        %v1844 = vld [vmem:[%s586 + $0x54] sm:$0xf]
        %v1845 = vld [vmem:[%s586 + $0x58] sm:$0xf]
        %v1846 = vld [vmem:[%s586 + $0x5c] sm:$0xf]
        %v1847 = vld [vmem:[%s586 + $0x60] sm:$0xf]
        %v1848 = vld [vmem:[%s586 + $0x64] sm:$0xf]
        %v1849 = vld [vmem:[%s586 + $0x68] sm:$0xf]
        %v1850 = vld [vmem:[%s586 + $0x6c] sm:$0xf]
        %v1851 = vld [vmem:[%s586 + $0x70] sm:$0xf]
        %v1852 = vld [vmem:[%s586 + $0x74] sm:$0xf]
        %v1853 = vld [vmem:[%s586 + $0x78] sm:$0xf]
        %v1854 = vld [vmem:[%s586 + $0x7c] sm:$0xf]
        %v1855 = vlaneseq
        %v1856 = vshrl.u32 %v1855, 7
        %v1857 = vsub.s32 5, %v1856
        %v1858 = vrot.slane %v695, %v1857
        %v1891 = vunpack.c.l.b16 %v1823
        %v1892 = vunpack.c.l.b16 %v1824
        %v1893 = vunpack.c.l.b16 %v1825
        %v1894 = vunpack.c.l.b16 %v1826
        %v1895 = vunpack.c.l.b16 %v1827
        %v1896 = vunpack.c.l.b16 %v1828
        %v1897 = vunpack.c.l.b16 %v1829
        %v1898 = vunpack.c.l.b16 %v1830
        %v1899 = vunpack.c.l.b16 %v1831
        %v1900 = vunpack.c.l.b16 %v1832
        %v1901 = vunpack.c.l.b16 %v1833
        %v1902 = vunpack.c.l.b16 %v1834
        %v1903 = vunpack.c.l.b16 %v1835
        %v1904 = vunpack.c.l.b16 %v1836
        %v1905 = vunpack.c.l.b16 %v1837
        %v1906 = vunpack.c.l.b16 %v1838
        %v1907 = vunpack.c.l.b16 %v1839
        %v1908 = vunpack.c.l.b16 %v1840
        %v1909 = vunpack.c.l.b16 %v1841
        %v1910 = vunpack.c.l.b16 %v1842
        %v1911 = vunpack.c.l.b16 %v1843
        %v1912 = vunpack.c.l.b16 %v1844
        %v1913 = vunpack.c.l.b16 %v1845
        %v1914 = vunpack.c.l.b16 %v1846
        %v1915 = vunpack.c.l.b16 %v1847
        %v1916 = vunpack.c.l.b16 %v1848
        %v1917 = vunpack.c.l.b16 %v1849
        %v1918 = vunpack.c.l.b16 %v1850
        %v1919 = vunpack.c.l.b16 %v1851
        %v1920 = vunpack.c.l.b16 %v1852
        %v1921 = vunpack.c.l.b16 %v1853
        %v1922 = vunpack.c.l.b16 %v1854
        %v1923 = vpack.c.b16 %v1892, %v1891
        %v1924 = vpack.c.b16 %v1894, %v1893
        %v1925 = vpack.c.b16 %v1896, %v1895
        %v1926 = vpack.c.b16 %v1898, %v1897
        %v1927 = vpack.c.b16 %v1900, %v1899
        %v1928 = vpack.c.b16 %v1902, %v1901
        %v1929 = vpack.c.b16 %v1904, %v1903
        %v1930 = vpack.c.b16 %v1906, %v1905
        %v1931 = vpack.c.b16 %v1908, %v1907
        %v1932 = vpack.c.b16 %v1910, %v1909
        %v1933 = vpack.c.b16 %v1912, %v1911
        %v1934 = vpack.c.b16 %v1914, %v1913
        %v1935 = vpack.c.b16 %v1916, %v1915
        %v1936 = vpack.c.b16 %v1918, %v1917
        %v1937 = vpack.c.b16 %v1920, %v1919
        %v1938 = vpack.c.b16 %v1922, %v1921
        %1955 = vmatprep.subr.bf16.mxu0 0
        %1956 = vmatpush1.bf16.msra.mxu0 %v1923
        %1957 = vmatprep.subr.bf16.mxu0 0
        %1958 = vmatpush1.bf16.msra.mxu0 %v1924
        %1959 = vmatprep.subr.bf16.mxu0 0
        %1960 = vmatpush1.bf16.msra.mxu0 %v1925
        %1961 = vmatprep.subr.bf16.mxu0 0
        %1962 = vmatpush1.bf16.msra.mxu0 %v1926
        %1963 = vmatprep.subr.bf16.mxu0 0
        %1964 = vmatpush1.bf16.msra.mxu0 %v1927
        %1965 = vmatprep.subr.bf16.mxu0 0
        %1966 = vmatpush1.bf16.msra.mxu0 %v1928
        %1967 = vmatprep.subr.bf16.mxu0 0
        %1968 = vmatpush1.bf16.msra.mxu0 %v1929
        %1969 = vmatprep.subr.bf16.mxu0 0
        %1970 = vmatpush1.bf16.msra.mxu0 %v1930
        %1971 = vmatprep.subr.bf16.mxu0 0
        %1972 = vmatpush1.bf16.msra.mxu0 %v1931
        %1973 = vmatprep.subr.bf16.mxu0 0
        %1974 = vmatpush1.bf16.msra.mxu0 %v1932
        %1975 = vmatprep.subr.bf16.mxu0 0
        %1976 = vmatpush1.bf16.msra.mxu0 %v1933
        %1977 = vmatprep.subr.bf16.mxu0 0
        %1978 = vmatpush1.bf16.msra.mxu0 %v1934
        %1979 = vmatprep.subr.bf16.mxu0 0
        %1980 = vmatpush1.bf16.msra.mxu0 %v1935
        %1981 = vmatprep.subr.bf16.mxu0 0
        %1982 = vmatpush1.bf16.msra.mxu0 %v1936
        %1983 = vmatprep.subr.bf16.mxu0 0
        %1984 = vmatpush1.bf16.msra.mxu0 %v1937
        %1985 = vmatprep.subr.bf16.mxu0 0
        %1986 = vmatpush1.bf16.msra.mxu0 %v1938
        %1987 = vmatprep.mubr.bf16.mxu0 %v1822
        %1988 = vmatmul.mubr.bf16.gmra.mrb[0].mxu0 %v1821
        %v1989 = vpop.f32.mrb[0].mxu0
        %v1990 = vadd.f32 %v1858, %v1989
        %v1991 = vpop.f32.mrb[0].mxu0
        %v1992 = vpop.f32.mrb[0].mxu0
        %v1993 = vadd.f32 %v1858, %v1992
        %v1994 = vpop.f32.mrb[0].mxu0
        %1995 = vdwg.mxu0
        %v1996 = vadd.f32 %v1601, %v1990
        %v1997 = vadd.f32 %v1602, %v1993
        %1998 = vst [vmem:[#allocation2] sm:$0xff] %v1996
        %1999 = vst [vmem:[#allocation2 + $0x8] sm:$0xff] %v1997
        %p2000 = scmp.eq.s32.totalorder %s44, 1
        // Predicated region
        $region105: #{tpu_custom_call.1} parent=59 // pred_check
          %p2001 = pneg %p2000
        $region106: #{tpu_custom_call.1} parent=59 // pred_check_branch
          %2003 = sbr.rel (%p2001) target = $region108
        $region107: #{tpu_custom_call.1} parent=59 // pred_region
          %v2004 = vld [vmem:[#allocation2] sm:$0xff]
          %v2005 = vmul.f32 %v2004, 0.5
          %v2006 = vmul.f32 %v2005, 1.442695
          %v2007 = vpow.pop %v2006
          %v2008 = vld [vmem:[%s668] sm:$0x1]
          %v2009 = vtanh.pop %v2007
          %v2012 = vunpack.c.l.s4 1966171168
          %v2013 = vunpack.c.0.s8 %v2012
          %v2014 = vlaneseq
          %v2015 = vshrl.u32 %v2014, 7
          %v2016 = vsub.s32 %v2013, %v2015
          %v2017 = vrot.slane %v2009, %v2016
          %v2018 = vcombine.high %v2017, %v2017
          %v2020 = vunpack.c.l.s4 1966171168
          %v2021 = vunpack.c.0.s8 %v2020
          %v2022 = vlaneseq
          %v2023 = vshrl.u32 %v2022, 7
          %v2024 = vsub.s32 %v2021, %v2023
          %v2025 = vrot.slane %v2018, %v2024
          %v2027 = vmul.f32 %v2008, %v2025
          %v2028 = vadd.f32 %v2004, %v2027
          %2029 = vst [vmem:[#allocation3] sm:$0x1] %v2028
        $region108: #{tpu_custom_call.1} parent=59 // pred_fallthru
          _
        %p2030 = scmp.eq.s32.totalorder %s43, 1
        %p2031 = pnand %p2030, %p2000
        %p2032 = pneg %p2031
        // Predicated region
        $region109: #{tpu_custom_call.1} parent=59 // pred_check
          _
        $region110: #{tpu_custom_call.1} parent=59 // pred_check_branch
          %2034 = sbr.rel (%p2031) target = $region112
        $region111: #{tpu_custom_call.1} parent=59 // pred_region
          %v2035 = vld [vmem:[#allocation2] sm:$0x3]
          %2036 = vst [vmem:[%s661] sm:$0x3] %v2035
        $region112: #{tpu_custom_call.1} parent=59 // pred_fallthru
          _
        %s2037 = sand.u32 %s319, 1
        %s2038 = scalar_lea.sflag [#allocation8], %s2037
        %s2039 = sand.u32 %s319, 1
        %s2040 = smul.addr %s2039, 2
        %s2041 = scalar_lea.vmem [#allocation21], %s2040
        // Predicated region
        $region113: #{tpu_custom_call.1} parent=59 // pred_check
          %p2042 = pneg %p329
        $region114: #{tpu_custom_call.1} parent=59 // pred_check_branch
          %2044 = sbr.rel (%p2042) target = $region116
        $region115: #{tpu_custom_call.1} parent=59 // pred_region
          %s2046 = ssub.s32 32, 32
          %2047 = vsyncadd %s2038, %s2046
          %s2048 = smul.addr %s42, 32
          %s2049 = scalar_lea.hbm %s10, %s2048
          %s2051 = sshll.u32 %s2041, 4
          %s2052 = int_to_ptr.vmem [resolvable:$true] %s2051
          %2054 = dma.vmem_to_hbm [thread:$0]  %s2052, 32, %s2049, %s2038
        $region116: #{tpu_custom_call.1} parent=59 // pred_fallthru
          _
      $region60: #{tpu_custom_call.1} parent=5 // pred_fallthru
        _
      %p2055 = scmp.le.s32.totalorder 2, %s32
      // Predicated region
      $region117: #{tpu_custom_call.1} parent=5 // pred_check
        %p2056 = pneg %p2055
      $region118: #{tpu_custom_call.1} parent=5 // pred_check_branch
        %2058 = sbr.rel (%p2056) target = $region120
      $region119: #{tpu_custom_call.1} parent=5 // pred_region
        %s2059 = ssub.s32 %s32, 2
        // Predicated region
        $region121: #{tpu_custom_call.1} parent=119 // pred_check
          %p2060 = pneg %p335
        $region122: #{tpu_custom_call.1} parent=119 // pred_check_branch
          %2062 = sbr.rel (%p2060) target = $region124
        $region123: #{tpu_custom_call.1} parent=119 // pred_region
          %s2063 = sand.u32 %s320, 1
          %s2064 = scalar_lea.sflag [#allocation8], %s2063
          %s2065 = sand.u32 %s320, 1
          %s2066 = smul.addr %s2065, 2
          %s2067 = scalar_lea.vmem [#allocation21], %s2066
          %2068 = dma.done %s2064, 32
        $region124: #{tpu_custom_call.1} parent=119 // pred_fallthru
          _
      $region120: #{tpu_custom_call.1} parent=5 // pred_fallthru
        _
    $region6: #{tpu_custom_call.1} parent=1 // loop_footer
      %s36 = sadd.s32 1, %s32
    $region7: #{tpu_custom_call.1} parent=1 // loop_footer_branch
      %31 = sbr.rel target = $region3
    $region8: #{tpu_custom_call.1} parent=1 // loop_exit
      _
    %2069 = vsyncpa [#allocation7], 1
    %s2070 = scalar_lea.sflag [#allocation7], 1
    %2071 = vsyncpa %s2070, 1
    %2072 = vsyncpa [#allocation10], 1
    %s2073 = scalar_lea.sflag [#allocation10], 1
    %2074 = vsyncpa %s2073, 1
    %2075 = vsyncpa [#allocation13], 1
    %s2076 = scalar_lea.sflag [#allocation13], 1
    %2077 = vsyncpa %s2076, 1
    %2078 = vsyncpa [#allocation16], 1
    %s2079 = scalar_lea.sflag [#allocation16], 1
    %2080 = vsyncpa %s2079, 1
    %2081 = vsyncpa [#allocation19], 1
    %2082 = vsyncpa [#allocation8], 1
    %s2083 = scalar_lea.sflag [#allocation8], 1
    %2084 = vsyncpa %s2083, 1

</llo_original>
